<compile_context>
chip_gen: v7x
topology: tpu7x:2x2x1
jax: 0.10.0
libtpu: 0.0.40
codegen_flags: <defaults>
</compile_context>

<pallas_src>
import jax
import jax.numpy as jnp
from jax.experimental import pallas as pl
from jax.experimental.pallas import tpu as pltpu

NEG_SLOPE = 0.01  # torch.nn.LeakyReLU default negative_slope


def _leaky_relu(h):
    return jnp.where(h > 0, h, NEG_SLOPE * h)


def discriminator_kernel(x_ref,
                         w1_ref, b1_ref,
                         w2_ref, b2_ref,
                         w3_ref, b3_ref,
                         w4_ref, b4_ref,
                         w5_ref, b5_ref,
                         out_ref):
    """One batch tile of the MLP forward.

    x_ref:   (tm, n_dims)     f32  activations (cast to bf16 in-kernel)
    wK_ref:  (n_dims, n_dims) bf16 for K=1..4
    bK_ref:  (1, n_dims)      f32  for K=1..4
    w5_ref:  (1, n_dims)      f32  (final Linear weight, transposed row)
    b5_ref:  (1, 1)           f32
    out_ref: (tm, 1)          f32  per-row score

    The tile is split into two independent half-tiles whose layer chains are
    traced interleaved: each step is latency-bound on the serial
    matmul -> result-pop -> LeakyReLU -> bf16-cast chain, so two independent
    dependency chains let the scheduler overlap one half's MXU drain with the
    other half's VPU work.
    """
    tm = x_ref.shape[0]
    half = tm // 2

    def layer(h, w_ref, b_ref):
        acc = jnp.dot(h.astype(jnp.bfloat16), w_ref[...],
                      preferred_element_type=jnp.float32) + b_ref[...]
        return _leaky_relu(acc)

    def head(h):
        # Final Linear(n_dims -> 1): broadcast-multiply + lane reduction (XLU),
        # stored as a (half, 1) block -- no 128-lane padding of the output.
        return jnp.sum(h * w5_ref[...], axis=-1, keepdims=True) + b5_ref[...]

    x = x_ref[...]
    ha = x[:half, :]
    hb = x[half:, :]
    for w_ref, b_ref in ((w1_ref, b1_ref), (w2_ref, b2_ref),
                         (w3_ref, b3_ref), (w4_ref, b4_ref)):
        ha = layer(ha, w_ref, b_ref)
        hb = layer(hb, w_ref, b_ref)
    out_ref[:half, :] = head(ha)
    out_ref[half:, :] = head(hb)


def init_params(key, n_values, n_groups):
    """Deterministic parameter init mirroring the PyTorch module's shapes.

    PyTorch Linear weight shape is (out, in); we store transposed (in, out).
    """
    n_dims = n_values * n_groups
    keys = jax.random.split(key, 10)
    params = []
    dims = [(n_dims, n_dims)] * 4 + [(n_dims, 1)]
    for i, (din, dout) in enumerate(dims):
        scale = 1.0 / jnp.sqrt(jnp.float32(din))
        w = jax.random.uniform(keys[2 * i], (din, dout), jnp.float32,
                               minval=-scale, maxval=scale)
        b = jax.random.uniform(keys[2 * i + 1], (1, dout), jnp.float32,
                               minval=-scale, maxval=scale)
        params.append((w, b))
    return params


def discriminator_forward(x, params, *, tm=None):
    """Pallas forward: returns scores of shape (B,) like backbone(x).squeeze(1)."""
    B, n_dims = x.shape
    (w1, b1), (w2, b2), (w3, b3), (w4, b4), (w5, b5) = params

    # --- batch tile selection ------------------------------------------------
    # Default: two balanced tiles (keeps both TensorCores busy on v7x while
    # amortizing the per-grid-step overhead on v5e/v6e), capped at 1024 rows,
    # rounded to a multiple of 16 (bf16 packs 16 sublanes per vreg) and never
    # over-padding tiny batches.
    if tm is None:
        tm = min(1024, pl.cdiv(B, 2))
    tm = max(16, pl.cdiv(tm, 16) * 16)
    tm = min(tm, pl.cdiv(B, 16) * 16)
    grid = (pl.cdiv(B, tm),)

    # Hidden-layer weights in bf16 (f32 MXU accumulation); x stays f32 and is
    # cast in-kernel.  No host-side padding: the ragged last tile's OOB output
    # rows are masked on write and rows are independent.
    w1b, w2b, w3b, w4b = (w.astype(jnp.bfloat16) for w in (w1, w2, w3, w4))
    w5_row = w5.T            # (1, n_dims) f32
    b5s = b5                 # (1, 1)      f32

    def full(arr):
        # Constant index_map -> block stays resident in VMEM across grid steps.
        return pl.BlockSpec(arr.shape, lambda i: (0, 0))

    resident = (w1b, b1, w2b, b2, w3b, b3, w4b, b4, w5_row, b5s)

    flops = 2 * B * (4 * n_dims * n_dims + n_dims)
    bytes_accessed = (B * n_dims * x.dtype.itemsize
                      + sum(int(a.size) * a.dtype.itemsize for a in resident)
                      + B * 4)
    cost = pl.CostEstimate(flops=flops, transcendentals=0,
                           bytes_accessed=bytes_accessed)

    compiler_kwargs = dict(dimension_semantics=("parallel",))
    resident_bytes = 2 * sum(int(a.size) * a.dtype.itemsize for a in resident)
    if resident_bytes > (24 << 20):
        # Resident weights are double-buffered by the pipeline even with
        # constant index maps; raise the scoped-VMEM limit for large n_dims
        # (kept below v7x's 64 MiB physical VMEM).
        # TODO(synk): beyond n_dims ~ 2048, stream weights per layer instead
        #             of keeping them resident (v7x VMEM hazard).
        x_tile_bytes = 2 * tm * n_dims * x.dtype.itemsize
        compiler_kwargs["vmem_limit_bytes"] = int(
            min(resident_bytes + x_tile_bytes + (4 << 20), 60 << 20))

    out = pl.pallas_call(
        discriminator_kernel,
        out_shape=jax.ShapeDtypeStruct((B, 1), jnp.float32),
        grid_spec=pltpu.PrefetchScalarGridSpec(
            num_scalar_prefetch=0,
            grid=grid,
            in_specs=[
                pl.BlockSpec((tm, n_dims), lambda i: (i, 0)),   # streamed x tile
                full(w1b), full(b1),
                full(w2b), full(b2),
                full(w3b), full(b3),
                full(w4b), full(b4),
                full(w5_row), full(b5s),
            ],
            out_specs=pl.BlockSpec((tm, 1), lambda i: (i, 0)),
        ),
        compiler_params=pltpu.CompilerParams(**compiler_kwargs),
        cost_estimate=cost,
    )(x, w1b, b1, w2b, b2, w3b, b3, w4b, b4, w5_row, b5s)

    return out[:, 0]  # squeeze(1)


def reference_forward(x, params):
    """Pure-JAX reference mirroring the kernel's bf16-weight / f32-accum math."""
    (w1, b1), (w2, b2), (w3, b3), (w4, b4), (w5, b5) = params
    h = x
    for w, b in [(w1, b1), (w2, b2), (w3, b3), (w4, b4)]:
        acc = jnp.dot(h.astype(jnp.bfloat16), w.astype(jnp.bfloat16),
                      preferred_element_type=jnp.float32) + b
        h = _leaky_relu(acc)
    return (h @ w5 + b5)[:, 0]


if __name__ == "__main__":
    n_values, n_groups = 16, 8          # n_dims = 128
    n_dims = n_values * n_groups
    B = 500                              # deliberately not a multiple of tm

    key = jax.random.PRNGKey(0)
    kx, kp = jax.random.split(key)
    x = jax.random.normal(kx, (B, n_dims), jnp.float32)
    params = init_params(kp, n_values, n_groups)

    fwd = jax.jit(lambda xx: discriminator_forward(xx, params))
    scores = jax.block_until_ready(fwd(x))

    ref = reference_forward(x, params)
    assert scores.shape == (B,)
    assert jnp.allclose(scores, ref, atol=5e-3, rtol=5e-3), (scores[:8], ref[:8])

    # TODO(synk): train_loss / get_score (autograd gradient penalty, random
    # one-hot targets) are training-time host logic, not part of the forward
    # kernel.

    print("KERNEL_OK")
</pallas_src>

<mosaic_0001>
module attributes {stable_mosaic.version = 11 : i64} {
  func.func @discriminator_kernel(%arg0: i32, %arg1: memref<256x128xf32, #tpu.memory_space<vmem>>, %arg2: memref<128x128xbf16, #tpu.memory_space<vmem>>, %arg3: memref<1x128xf32, #tpu.memory_space<vmem>>, %arg4: memref<128x128xbf16, #tpu.memory_space<vmem>>, %arg5: memref<1x128xf32, #tpu.memory_space<vmem>>, %arg6: memref<128x128xbf16, #tpu.memory_space<vmem>>, %arg7: memref<1x128xf32, #tpu.memory_space<vmem>>, %arg8: memref<128x128xbf16, #tpu.memory_space<vmem>>, %arg9: memref<1x128xf32, #tpu.memory_space<vmem>>, %arg10: memref<1x128xf32, #tpu.memory_space<vmem>>, %arg11: memref<1x1xf32, #tpu.memory_space<vmem>>, %arg12: memref<256x1xf32, #tpu.memory_space<vmem>>) attributes {dimension_semantics = [#tpu.dimension_semantics<parallel>], iteration_bounds = array<i64: 2>, scalar_prefetch = 0 : i64, scratch_operands = 0 : i64, tpu.core_type = #tpu.core_type<tc>, window_params = [{transform_indices = @transform_0, window_bounds = array<i64: 256, 128>}, {pipeline_mode = #tpu.pipeline_mode<synchronous>, transform_indices = @transform_1, window_bounds = array<i64: 128, 128>}, {pipeline_mode = #tpu.pipeline_mode<synchronous>, transform_indices = @transform_2, window_bounds = array<i64: 1, 128>}, {pipeline_mode = #tpu.pipeline_mode<synchronous>, transform_indices = @transform_3, window_bounds = array<i64: 128, 128>}, {pipeline_mode = #tpu.pipeline_mode<synchronous>, transform_indices = @transform_4, window_bounds = array<i64: 1, 128>}, {pipeline_mode = #tpu.pipeline_mode<synchronous>, transform_indices = @transform_5, window_bounds = array<i64: 128, 128>}, {pipeline_mode = #tpu.pipeline_mode<synchronous>, transform_indices = @transform_6, window_bounds = array<i64: 1, 128>}, {pipeline_mode = #tpu.pipeline_mode<synchronous>, transform_indices = @transform_7, window_bounds = array<i64: 128, 128>}, {pipeline_mode = #tpu.pipeline_mode<synchronous>, transform_indices = @transform_8, window_bounds = array<i64: 1, 128>}, {pipeline_mode = #tpu.pipeline_mode<synchronous>, transform_indices = @transform_9, window_bounds = array<i64: 1, 128>}, {pipeline_mode = #tpu.pipeline_mode<synchronous>, transform_indices = @transform_10, window_bounds = array<i64: 1, 1>}, {transform_indices = @transform_11, window_bounds = array<i64: 256, 1>}]} {
    %c0 = arith.constant 0 : index
    %c0_0 = arith.constant 0 : index
    %0 = vector.load %arg1[%c0, %c0_0] : memref<256x128xf32, #tpu.memory_space<vmem>>, vector<256x128xf32>
    %1 = vector.extract_strided_slice %0 {offsets = [0, 0], sizes = [128, 128], strides = [1, 1]} : vector<256x128xf32> to vector<128x128xf32>
    %2 = vector.extract_strided_slice %0 {offsets = [128, 0], sizes = [128, 128], strides = [1, 1]} : vector<256x128xf32> to vector<128x128xf32>
    %3 = arith.truncf %1 : vector<128x128xf32> to vector<128x128xbf16>
    %c0_1 = arith.constant 0 : index
    %c0_2 = arith.constant 0 : index
    %4 = vector.load %arg2[%c0_1, %c0_2] : memref<128x128xbf16, #tpu.memory_space<vmem>>, vector<128x128xbf16>
    %cst = arith.constant dense<0.000000e+00> : vector<128x128xf32>
    %5 = tpu.matmul %3, %4, %cst {dimension_numbers = #tpu.dot_dimension_numbers<[1], [0], [0], [1], [0, 0, 1, 1], [], []>} : vector<128x128xbf16>, vector<128x128xbf16>, vector<128x128xf32> -> vector<128x128xf32>
    %c0_3 = arith.constant 0 : index
    %c0_4 = arith.constant 0 : index
    %6 = vector.load %arg3[%c0_3, %c0_4] : memref<1x128xf32, #tpu.memory_space<vmem>>, vector<1x128xf32>
    %7 = vector.broadcast %6 : vector<1x128xf32> to vector<128x128xf32>
    %8 = arith.addf %5, %7 : vector<128x128xf32>
    %cst_5 = arith.constant 0.000000e+00 : f32
    %9 = vector.broadcast %cst_5 : f32 to vector<128x128xf32>
    %10 = arith.cmpf ogt, %8, %9 : vector<128x128xf32>
    %cst_6 = arith.constant 0.00999999977 : f32
    %11 = vector.broadcast %cst_6 : f32 to vector<128x128xf32>
    %12 = arith.mulf %11, %8 : vector<128x128xf32>
    %13 = arith.select %10, %8, %12 : vector<128x128xi1>, vector<128x128xf32>
    %14 = arith.truncf %2 : vector<128x128xf32> to vector<128x128xbf16>
    %c0_7 = arith.constant 0 : index
    %c0_8 = arith.constant 0 : index
    %15 = vector.load %arg2[%c0_7, %c0_8] : memref<128x128xbf16, #tpu.memory_space<vmem>>, vector<128x128xbf16>
    %cst_9 = arith.constant dense<0.000000e+00> : vector<128x128xf32>
    %16 = tpu.matmul %14, %15, %cst_9 {dimension_numbers = #tpu.dot_dimension_numbers<[1], [0], [0], [1], [0, 0, 1, 1], [], []>} : vector<128x128xbf16>, vector<128x128xbf16>, vector<128x128xf32> -> vector<128x128xf32>
    %c0_10 = arith.constant 0 : index
    %c0_11 = arith.constant 0 : index
    %17 = vector.load %arg3[%c0_10, %c0_11] : memref<1x128xf32, #tpu.memory_space<vmem>>, vector<1x128xf32>
    %18 = vector.broadcast %17 : vector<1x128xf32> to vector<128x128xf32>
    %19 = arith.addf %16, %18 : vector<128x128xf32>
    %cst_12 = arith.constant 0.000000e+00 : f32
    %20 = vector.broadcast %cst_12 : f32 to vector<128x128xf32>
    %21 = arith.cmpf ogt, %19, %20 : vector<128x128xf32>
    %cst_13 = arith.constant 0.00999999977 : f32
    %22 = vector.broadcast %cst_13 : f32 to vector<128x128xf32>
    %23 = arith.mulf %22, %19 : vector<128x128xf32>
    %24 = arith.select %21, %19, %23 : vector<128x128xi1>, vector<128x128xf32>
    %25 = arith.truncf %13 : vector<128x128xf32> to vector<128x128xbf16>
    %c0_14 = arith.constant 0 : index
    %c0_15 = arith.constant 0 : index
    %26 = vector.load %arg4[%c0_14, %c0_15] : memref<128x128xbf16, #tpu.memory_space<vmem>>, vector<128x128xbf16>
    %cst_16 = arith.constant dense<0.000000e+00> : vector<128x128xf32>
    %27 = tpu.matmul %25, %26, %cst_16 {dimension_numbers = #tpu.dot_dimension_numbers<[1], [0], [0], [1], [0, 0, 1, 1], [], []>} : vector<128x128xbf16>, vector<128x128xbf16>, vector<128x128xf32> -> vector<128x128xf32>
    %c0_17 = arith.constant 0 : index
    %c0_18 = arith.constant 0 : index
    %28 = vector.load %arg5[%c0_17, %c0_18] : memref<1x128xf32, #tpu.memory_space<vmem>>, vector<1x128xf32>
    %29 = vector.broadcast %28 : vector<1x128xf32> to vector<128x128xf32>
    %30 = arith.addf %27, %29 : vector<128x128xf32>
    %cst_19 = arith.constant 0.000000e+00 : f32
    %31 = vector.broadcast %cst_19 : f32 to vector<128x128xf32>
    %32 = arith.cmpf ogt, %30, %31 : vector<128x128xf32>
    %cst_20 = arith.constant 0.00999999977 : f32
    %33 = vector.broadcast %cst_20 : f32 to vector<128x128xf32>
    %34 = arith.mulf %33, %30 : vector<128x128xf32>
    %35 = arith.select %32, %30, %34 : vector<128x128xi1>, vector<128x128xf32>
    %36 = arith.truncf %24 : vector<128x128xf32> to vector<128x128xbf16>
    %c0_21 = arith.constant 0 : index
    %c0_22 = arith.constant 0 : index
    %37 = vector.load %arg4[%c0_21, %c0_22] : memref<128x128xbf16, #tpu.memory_space<vmem>>, vector<128x128xbf16>
    %cst_23 = arith.constant dense<0.000000e+00> : vector<128x128xf32>
    %38 = tpu.matmul %36, %37, %cst_23 {dimension_numbers = #tpu.dot_dimension_numbers<[1], [0], [0], [1], [0, 0, 1, 1], [], []>} : vector<128x128xbf16>, vector<128x128xbf16>, vector<128x128xf32> -> vector<128x128xf32>
    %c0_24 = arith.constant 0 : index
    %c0_25 = arith.constant 0 : index
    %39 = vector.load %arg5[%c0_24, %c0_25] : memref<1x128xf32, #tpu.memory_space<vmem>>, vector<1x128xf32>
    %40 = vector.broadcast %39 : vector<1x128xf32> to vector<128x128xf32>
    %41 = arith.addf %38, %40 : vector<128x128xf32>
    %cst_26 = arith.constant 0.000000e+00 : f32
    %42 = vector.broadcast %cst_26 : f32 to vector<128x128xf32>
    %43 = arith.cmpf ogt, %41, %42 : vector<128x128xf32>
    %cst_27 = arith.constant 0.00999999977 : f32
    %44 = vector.broadcast %cst_27 : f32 to vector<128x128xf32>
    %45 = arith.mulf %44, %41 : vector<128x128xf32>
    %46 = arith.select %43, %41, %45 : vector<128x128xi1>, vector<128x128xf32>
    %47 = arith.truncf %35 : vector<128x128xf32> to vector<128x128xbf16>
    %c0_28 = arith.constant 0 : index
    %c0_29 = arith.constant 0 : index
    %48 = vector.load %arg6[%c0_28, %c0_29] : memref<128x128xbf16, #tpu.memory_space<vmem>>, vector<128x128xbf16>
    %cst_30 = arith.constant dense<0.000000e+00> : vector<128x128xf32>
    %49 = tpu.matmul %47, %48, %cst_30 {dimension_numbers = #tpu.dot_dimension_numbers<[1], [0], [0], [1], [0, 0, 1, 1], [], []>} : vector<128x128xbf16>, vector<128x128xbf16>, vector<128x128xf32> -> vector<128x128xf32>
    %c0_31 = arith.constant 0 : index
    %c0_32 = arith.constant 0 : index
    %50 = vector.load %arg7[%c0_31, %c0_32] : memref<1x128xf32, #tpu.memory_space<vmem>>, vector<1x128xf32>
    %51 = vector.broadcast %50 : vector<1x128xf32> to vector<128x128xf32>
    %52 = arith.addf %49, %51 : vector<128x128xf32>
    %cst_33 = arith.constant 0.000000e+00 : f32
    %53 = vector.broadcast %cst_33 : f32 to vector<128x128xf32>
    %54 = arith.cmpf ogt, %52, %53 : vector<128x128xf32>
    %cst_34 = arith.constant 0.00999999977 : f32
    %55 = vector.broadcast %cst_34 : f32 to vector<128x128xf32>
    %56 = arith.mulf %55, %52 : vector<128x128xf32>
    %57 = arith.select %54, %52, %56 : vector<128x128xi1>, vector<128x128xf32>
    %58 = arith.truncf %46 : vector<128x128xf32> to vector<128x128xbf16>
    %c0_35 = arith.constant 0 : index
    %c0_36 = arith.constant 0 : index
    %59 = vector.load %arg6[%c0_35, %c0_36] : memref<128x128xbf16, #tpu.memory_space<vmem>>, vector<128x128xbf16>
    %cst_37 = arith.constant dense<0.000000e+00> : vector<128x128xf32>
    %60 = tpu.matmul %58, %59, %cst_37 {dimension_numbers = #tpu.dot_dimension_numbers<[1], [0], [0], [1], [0, 0, 1, 1], [], []>} : vector<128x128xbf16>, vector<128x128xbf16>, vector<128x128xf32> -> vector<128x128xf32>
    %c0_38 = arith.constant 0 : index
    %c0_39 = arith.constant 0 : index
    %61 = vector.load %arg7[%c0_38, %c0_39] : memref<1x128xf32, #tpu.memory_space<vmem>>, vector<1x128xf32>
    %62 = vector.broadcast %61 : vector<1x128xf32> to vector<128x128xf32>
    %63 = arith.addf %60, %62 : vector<128x128xf32>
    %cst_40 = arith.constant 0.000000e+00 : f32
    %64 = vector.broadcast %cst_40 : f32 to vector<128x128xf32>
    %65 = arith.cmpf ogt, %63, %64 : vector<128x128xf32>
    %cst_41 = arith.constant 0.00999999977 : f32
    %66 = vector.broadcast %cst_41 : f32 to vector<128x128xf32>
    %67 = arith.mulf %66, %63 : vector<128x128xf32>
    %68 = arith.select %65, %63, %67 : vector<128x128xi1>, vector<128x128xf32>
    %69 = arith.truncf %57 : vector<128x128xf32> to vector<128x128xbf16>
    %c0_42 = arith.constant 0 : index
    %c0_43 = arith.constant 0 : index
    %70 = vector.load %arg8[%c0_42, %c0_43] : memref<128x128xbf16, #tpu.memory_space<vmem>>, vector<128x128xbf16>
    %cst_44 = arith.constant dense<0.000000e+00> : vector<128x128xf32>
    %71 = tpu.matmul %69, %70, %cst_44 {dimension_numbers = #tpu.dot_dimension_numbers<[1], [0], [0], [1], [0, 0, 1, 1], [], []>} : vector<128x128xbf16>, vector<128x128xbf16>, vector<128x128xf32> -> vector<128x128xf32>
    %c0_45 = arith.constant 0 : index
    %c0_46 = arith.constant 0 : index
    %72 = vector.load %arg9[%c0_45, %c0_46] : memref<1x128xf32, #tpu.memory_space<vmem>>, vector<1x128xf32>
    %73 = vector.broadcast %72 : vector<1x128xf32> to vector<128x128xf32>
    %74 = arith.addf %71, %73 : vector<128x128xf32>
    %cst_47 = arith.constant 0.000000e+00 : f32
    %75 = vector.broadcast %cst_47 : f32 to vector<128x128xf32>
    %76 = arith.cmpf ogt, %74, %75 : vector<128x128xf32>
    %cst_48 = arith.constant 0.00999999977 : f32
    %77 = vector.broadcast %cst_48 : f32 to vector<128x128xf32>
    %78 = arith.mulf %77, %74 : vector<128x128xf32>
    %79 = arith.select %76, %74, %78 : vector<128x128xi1>, vector<128x128xf32>
    %80 = arith.truncf %68 : vector<128x128xf32> to vector<128x128xbf16>
    %c0_49 = arith.constant 0 : index
    %c0_50 = arith.constant 0 : index
    %81 = vector.load %arg8[%c0_49, %c0_50] : memref<128x128xbf16, #tpu.memory_space<vmem>>, vector<128x128xbf16>
    %cst_51 = arith.constant dense<0.000000e+00> : vector<128x128xf32>
    %82 = tpu.matmul %80, %81, %cst_51 {dimension_numbers = #tpu.dot_dimension_numbers<[1], [0], [0], [1], [0, 0, 1, 1], [], []>} : vector<128x128xbf16>, vector<128x128xbf16>, vector<128x128xf32> -> vector<128x128xf32>
    %c0_52 = arith.constant 0 : index
    %c0_53 = arith.constant 0 : index
    %83 = vector.load %arg9[%c0_52, %c0_53] : memref<1x128xf32, #tpu.memory_space<vmem>>, vector<1x128xf32>
    %84 = vector.broadcast %83 : vector<1x128xf32> to vector<128x128xf32>
    %85 = arith.addf %82, %84 : vector<128x128xf32>
    %cst_54 = arith.constant 0.000000e+00 : f32
    %86 = vector.broadcast %cst_54 : f32 to vector<128x128xf32>
    %87 = arith.cmpf ogt, %85, %86 : vector<128x128xf32>
    %cst_55 = arith.constant 0.00999999977 : f32
    %88 = vector.broadcast %cst_55 : f32 to vector<128x128xf32>
    %89 = arith.mulf %88, %85 : vector<128x128xf32>
    %90 = arith.select %87, %85, %89 : vector<128x128xi1>, vector<128x128xf32>
    %c0_56 = arith.constant 0 : index
    %c0_57 = arith.constant 0 : index
    %91 = vector.load %arg10[%c0_56, %c0_57] : memref<1x128xf32, #tpu.memory_space<vmem>>, vector<1x128xf32>
    %92 = vector.broadcast %91 : vector<1x128xf32> to vector<128x128xf32>
    %93 = arith.mulf %79, %92 : vector<128x128xf32>
    %cst_58 = arith.constant dense<0.000000e+00> : vector<128xf32>
    %94 = vector.multi_reduction <add>, %93, %cst_58 [1] : vector<128x128xf32> to vector<128xf32>
    %95 = vector.shape_cast %94 : vector<128xf32> to vector<128x1xf32>
    %c0_59 = arith.constant 0 : index
    %c0_60 = arith.constant 0 : index
    %96 = vector.load %arg11[%c0_59, %c0_60] : memref<1x1xf32, #tpu.memory_space<vmem>>, vector<1x1xf32>
    %97 = vector.broadcast %96 : vector<1x1xf32> to vector<128x1xf32>
    %98 = arith.addf %95, %97 : vector<128x1xf32>
    %c0_61 = arith.constant 0 : index
    %c0_62 = arith.constant 0 : index
    %99 = vector.load %arg12[%c0_61, %c0_62] : memref<256x1xf32, #tpu.memory_space<vmem>>, vector<128x1xf32>
    tpu.vector_store %arg12[%c0_61, %c0_62], %98 {strides = array<i32>} : memref<256x1xf32, #tpu.memory_space<vmem>>, vector<128x1xf32>,
    %c0_63 = arith.constant 0 : index
    %c0_64 = arith.constant 0 : index
    %100 = vector.load %arg10[%c0_63, %c0_64] : memref<1x128xf32, #tpu.memory_space<vmem>>, vector<1x128xf32>
    %101 = vector.broadcast %100 : vector<1x128xf32> to vector<128x128xf32>
    %102 = arith.mulf %90, %101 : vector<128x128xf32>
    %cst_65 = arith.constant dense<0.000000e+00> : vector<128xf32>
    %103 = vector.multi_reduction <add>, %102, %cst_65 [1] : vector<128x128xf32> to vector<128xf32>
    %104 = vector.shape_cast %103 : vector<128xf32> to vector<128x1xf32>
    %c0_66 = arith.constant 0 : index
    %c0_67 = arith.constant 0 : index
    %105 = vector.load %arg11[%c0_66, %c0_67] : memref<1x1xf32, #tpu.memory_space<vmem>>, vector<1x1xf32>
    %106 = vector.broadcast %105 : vector<1x1xf32> to vector<128x1xf32>
    %107 = arith.addf %104, %106 : vector<128x1xf32>
    %c128 = arith.constant 128 : index
    %c0_68 = arith.constant 0 : index
    %108 = vector.load %arg12[%c128, %c0_68] : memref<256x1xf32, #tpu.memory_space<vmem>>, vector<128x1xf32>
    tpu.vector_store %arg12[%c128, %c0_68], %107 {strides = array<i32>} : memref<256x1xf32, #tpu.memory_space<vmem>>, vector<128x1xf32>,
    return
  }
  func.func @transform_0(%arg0: i32) -> (i32, i32) {
    %c0_i32 = arith.constant 0 : i32
    %c0_i32_0 = arith.constant 0 : i32
    return %arg0, %c0_i32 : i32, i32
  }
  func.func @transform_1(%arg0: i32) -> (i32, i32) {
    %c0_i32 = arith.constant 0 : i32
    %c0_i32_0 = arith.constant 0 : i32
    %c0_i32_1 = arith.constant 0 : i32
    return %c0_i32, %c0_i32_0 : i32, i32
  }
  func.func @transform_2(%arg0: i32) -> (i32, i32) {
    %c0_i32 = arith.constant 0 : i32
    %c0_i32_0 = arith.constant 0 : i32
    %c0_i32_1 = arith.constant 0 : i32
    return %c0_i32, %c0_i32_0 : i32, i32
  }
  func.func @transform_3(%arg0: i32) -> (i32, i32) {
    %c0_i32 = arith.constant 0 : i32
    %c0_i32_0 = arith.constant 0 : i32
    %c0_i32_1 = arith.constant 0 : i32
    return %c0_i32, %c0_i32_0 : i32, i32
  }
  func.func @transform_4(%arg0: i32) -> (i32, i32) {
    %c0_i32 = arith.constant 0 : i32
    %c0_i32_0 = arith.constant 0 : i32
    %c0_i32_1 = arith.constant 0 : i32
    return %c0_i32, %c0_i32_0 : i32, i32
  }
  func.func @transform_5(%arg0: i32) -> (i32, i32) {
    %c0_i32 = arith.constant 0 : i32
    %c0_i32_0 = arith.constant 0 : i32
    %c0_i32_1 = arith.constant 0 : i32
    return %c0_i32, %c0_i32_0 : i32, i32
  }
  func.func @transform_6(%arg0: i32) -> (i32, i32) {
    %c0_i32 = arith.constant 0 : i32
    %c0_i32_0 = arith.constant 0 : i32
    %c0_i32_1 = arith.constant 0 : i32
    return %c0_i32, %c0_i32_0 : i32, i32
  }
  func.func @transform_7(%arg0: i32) -> (i32, i32) {
    %c0_i32 = arith.constant 0 : i32
    %c0_i32_0 = arith.constant 0 : i32
    %c0_i32_1 = arith.constant 0 : i32
    return %c0_i32, %c0_i32_0 : i32, i32
  }
  func.func @transform_8(%arg0: i32) -> (i32, i32) {
    %c0_i32 = arith.constant 0 : i32
    %c0_i32_0 = arith.constant 0 : i32
    %c0_i32_1 = arith.constant 0 : i32
    return %c0_i32, %c0_i32_0 : i32, i32
  }
  func.func @transform_9(%arg0: i32) -> (i32, i32) {
    %c0_i32 = arith.constant 0 : i32
    %c0_i32_0 = arith.constant 0 : i32
    %c0_i32_1 = arith.constant 0 : i32
    return %c0_i32, %c0_i32_0 : i32, i32
  }
  func.func @transform_10(%arg0: i32) -> (i32, i32) {
    %c0_i32 = arith.constant 0 : i32
    %c0_i32_0 = arith.constant 0 : i32
    %c0_i32_1 = arith.constant 0 : i32
    return %c0_i32, %c0_i32_0 : i32, i32
  }
  func.func @transform_11(%arg0: i32) -> (i32, i32) {
    %c0_i32 = arith.constant 0 : i32
    %c0_i32_0 = arith.constant 0 : i32
    return %arg0, %c0_i32 : i32, i32
  }
}

</mosaic_0001>

<llo_original>
// kernel: _lambda_.1
$region0: #{_lambda_.1}
  #allocation0 [shape = 'u32[]', space=smem, size = 0x4, offset = 0x4, fixed_abs, tag = 'smem constant byte address 0x4 - core index']
  #allocation1 [shape = 'u32[144,128]{1,0:T(1,128)}', space=vmem, size = 0x12000, scoped, tag = 'internal scratch']
  #allocation2 [shape = 'f32[1,1]{1,0:T(1,128)S(1)}', space=vmem, size = 0x200, scoped, tag = 'scoped memory for _lambda_.1']
  %s0 = inlined_call_operand.hbm [shape: f32[500,128], index: 0, kind: input, shape index: {}]
  %s1 = inlined_call_operand.hbm [shape: bf16[128,128], index: 1, kind: input, shape index: {}]
  %s2 = inlined_call_operand.vmem [shape: f32[1,128], index: 2, kind: input, shape index: {}]
  %s3 = inlined_call_operand.hbm [shape: bf16[128,128], index: 3, kind: input, shape index: {}]
  %s4 = inlined_call_operand.vmem [shape: f32[1,128], index: 4, kind: input, shape index: {}]
  %s5 = inlined_call_operand.hbm [shape: bf16[128,128], index: 5, kind: input, shape index: {}]
  %s6 = inlined_call_operand.vmem [shape: f32[1,128], index: 6, kind: input, shape index: {}]
  %s7 = inlined_call_operand.hbm [shape: bf16[128,128], index: 7, kind: input, shape index: {}]
  %s8 = inlined_call_operand.vmem [shape: f32[1,128], index: 8, kind: input, shape index: {}]
  %s9 = inlined_call_operand.vmem [shape: f32[1,128], index: 9, kind: input, shape index: {}]
  %s10 = inlined_call_operand.<no memory space> [shape: f32[1,1], index: 10, kind: input, shape index: {}]
  %s11 = inlined_call_operand.vmem [shape: f32[500,1], index: 11, kind: output, shape index: {}]
  %s12 = sld [smem:[#allocation0]]
  $region145: #{_lambda_.1} parent=0
    _
  %s14 = ssub.s32 1, %s12
  %s15 = scalar_select 0, %s14, %s12
  %v16 = vstv %s10
  %17 = vst [vmem:[#allocation2] sm:$0x1] %v16
  $region1: #{_lambda_.1} parent=0
    #allocation3 [shape = 'u8[262144]{0}', space=vmem, size = 0x40000, scoped, tag = 'input window, operand 0']
    #allocation4 [shape = 's32[2]{0}', space=sflag, size = 0x8, scoped, tag = 'scoped memory for _lambda_.1']
    #allocation5 [shape = 'u8[32768]{0}', space=vmem, size = 0x8000, scoped, tag = 'input window, operand 1, single buffered']
    #allocation6 [shape = 's32[1]{0}', space=sflag, size = 0x4, scoped, tag = 'scoped memory for _lambda_.1']
    #allocation7 [shape = 'u8[32768]{0}', space=vmem, size = 0x8000, scoped, tag = 'input window, operand 3, single buffered']
    #allocation8 [shape = 'u8[32768]{0}', space=vmem, size = 0x8000, scoped, tag = 'input window, operand 5, single buffered']
    #allocation9 [shape = 's32[1]{0}', space=sflag, size = 0x4, scoped, tag = 'scoped memory for _lambda_.1']
    #allocation10 [shape = 'u8[32768]{0}', space=vmem, size = 0x8000, scoped, tag = 'input window, operand 7, single buffered']
    #allocation11 [shape = 'u8[262144]{0}', space=vmem, size = 0x40000, scoped, tag = 'output window, operand 0']
    %18 = vsyncpa [#allocation4], 0
    %s19 = scalar_lea.sflag [#allocation4], 1
    %20 = vsyncpa %s19, 0
    %21 = vsyncpa [#allocation6], 0
    %22 = vsyncpa [#allocation9], 0
    loop: start=0, step=1, limit=4
    $region2: #{_lambda_.1} parent=1 // loop_pre_header
      _
    $region3: #{_lambda_.1} parent=1 // loop_header
      %s24 = sphi 0, %s28
      %p25 = scmp.ge.s32.totalorder %s24, 4
      %s34 = sphi 0, %s36
      %s37 = sphi 0, %s34
      %s38 = sphi 0, %s37
      %s54 = sphi 0, %s38
      %s58 = sphi 0, %s58
      %s60 = sphi 0, %s58
      %s61 = sphi 0, %s60
      %s75 = sphi 0, %s61
      %s79 = sphi 0, %s79
      %s81 = sphi 0, %s79
      %s82 = sphi 0, %s81
      %s96 = sphi 0, %s82
      %s100 = sphi 0, %s100
      %s102 = sphi 0, %s100
      %s103 = sphi 0, %s102
      %s117 = sphi 0, %s103
      %s121 = sphi 0, %s121
      %s123 = sphi 0, %s121
      %s124 = sphi 0, %s123
      %s138 = sphi 0, %s124
      %s142 = sphi 0, %s142
      %s144 = sphi 0, %s142
      %s145 = sphi 0, %s144
      %s159 = sphi 0, %s145
      %s163 = sphi 0, %s163
      %s165 = sphi 0, %s163
      %s166 = sphi 0, %s165
      %s180 = sphi 0, %s166
      %s184 = sphi 0, %s184
      %s186 = sphi 0, %s184
      %s187 = sphi 0, %s186
      %s201 = sphi 0, %s187
      %s205 = sphi 0, %s205
      %s207 = sphi 0, %s205
      %s208 = sphi 0, %s207
      %s222 = sphi 0, %s208
      %s226 = sphi 0, %s226
      %s228 = sphi 0, %s226
      %s229 = sphi 0, %s228
      %s243 = sphi 0, %s229
      %s247 = sphi 0, %s247
      %s249 = sphi 0, %s247
      %s250 = sphi 0, %s249
      %s264 = sphi 0, %s250
      %s270 = sphi 0, %s272
      %s273 = sphi 0, %s270
      %s274 = sphi 0, %s273
      %s290 = sphi 0, %s274
    $region4: #{_lambda_.1} parent=1 // loop_header_branch
      %27 = sbr.rel (%p25) target = $region8
    $region5: #{_lambda_.1} parent=1 // loop_body
      %s29 = ssub.s32 %s24, 1
      %s30 = ssub.s32 %s24, 2
      %s31 = sadd.s32 %s24, 1
      %s32 = ssub.s32 %s24, %s31
      %p33 = scmp.eq.s32.totalorder %s32, 0
      %s35 = sadd.s32 %s34, 1
      %s36 = scalar_select %p33, %s34, %s35
      %p39 = pneg %p33
      %p40 = scmp.eq.s32.totalorder %s24, 1
      %p41 = por %p39, %p40
      %p42 = scmp.ne.s32.totalorder %s34, %s37
      %p43 = scmp.eq.s32.totalorder %s24, 0
      %p44 = por %p42, %p43
      %p45 = scmp.ne.s32.totalorder %s34, %s37
      %p46 = scmp.eq.s32.totalorder %s29, 1
      %p47 = por %p45, %p46
      %p48 = scmp.ne.s32.totalorder %s37, %s38
      %p49 = scmp.eq.s32.totalorder %s29, 0
      %p50 = por %p48, %p49
      %p51 = scmp.ne.s32.totalorder %s37, %s38
      %p52 = scmp.eq.s32.totalorder %s30, 1
      %p53 = por %p51, %p52
      %p55 = scmp.ne.s32.totalorder %s38, %s54
      %p56 = scmp.eq.s32.totalorder %s30, 0
      %p57 = por %p55, %p56
      %s59 = sadd.s32 %s58, 1
      %p62 = scmp.eq.s32.totalorder %s24, 1
      %p63 = scmp.ne.s32.totalorder %s58, %s60
      %p64 = scmp.eq.s32.totalorder %s24, 0
      %p65 = por %p63, %p64
      %p66 = scmp.ne.s32.totalorder %s58, %s60
      %p67 = scmp.eq.s32.totalorder %s29, 1
      %p68 = por %p66, %p67
      %p69 = scmp.ne.s32.totalorder %s60, %s61
      %p70 = scmp.eq.s32.totalorder %s29, 0
      %p71 = por %p69, %p70
      %p72 = scmp.ne.s32.totalorder %s60, %s61
      %p73 = scmp.eq.s32.totalorder %s30, 1
      %p74 = por %p72, %p73
      %p76 = scmp.ne.s32.totalorder %s61, %s75
      %p77 = scmp.eq.s32.totalorder %s30, 0
      %p78 = por %p76, %p77
      %s80 = sadd.s32 %s79, 1
      %p83 = scmp.eq.s32.totalorder %s24, 1
      %p84 = scmp.ne.s32.totalorder %s79, %s81
      %p85 = scmp.eq.s32.totalorder %s24, 0
      %p86 = por %p84, %p85
      %p87 = scmp.ne.s32.totalorder %s79, %s81
      %p88 = scmp.eq.s32.totalorder %s29, 1
      %p89 = por %p87, %p88
      %p90 = scmp.ne.s32.totalorder %s81, %s82
      %p91 = scmp.eq.s32.totalorder %s29, 0
      %p92 = por %p90, %p91
      %p93 = scmp.ne.s32.totalorder %s81, %s82
      %p94 = scmp.eq.s32.totalorder %s30, 1
      %p95 = por %p93, %p94
      %p97 = scmp.ne.s32.totalorder %s82, %s96
      %p98 = scmp.eq.s32.totalorder %s30, 0
      %p99 = por %p97, %p98
      %s101 = sadd.s32 %s100, 1
      %p104 = scmp.eq.s32.totalorder %s24, 1
      %p105 = scmp.ne.s32.totalorder %s100, %s102
      %p106 = scmp.eq.s32.totalorder %s24, 0
      %p107 = por %p105, %p106
      %p108 = scmp.ne.s32.totalorder %s100, %s102
      %p109 = scmp.eq.s32.totalorder %s29, 1
      %p110 = por %p108, %p109
      %p111 = scmp.ne.s32.totalorder %s102, %s103
      %p112 = scmp.eq.s32.totalorder %s29, 0
      %p113 = por %p111, %p112
      %p114 = scmp.ne.s32.totalorder %s102, %s103
      %p115 = scmp.eq.s32.totalorder %s30, 1
      %p116 = por %p114, %p115
      %p118 = scmp.ne.s32.totalorder %s103, %s117
      %p119 = scmp.eq.s32.totalorder %s30, 0
      %p120 = por %p118, %p119
      %s122 = sadd.s32 %s121, 1
      %p125 = scmp.eq.s32.totalorder %s24, 1
      %p126 = scmp.ne.s32.totalorder %s121, %s123
      %p127 = scmp.eq.s32.totalorder %s24, 0
      %p128 = por %p126, %p127
      %p129 = scmp.ne.s32.totalorder %s121, %s123
      %p130 = scmp.eq.s32.totalorder %s29, 1
      %p131 = por %p129, %p130
      %p132 = scmp.ne.s32.totalorder %s123, %s124
      %p133 = scmp.eq.s32.totalorder %s29, 0
      %p134 = por %p132, %p133
      %p135 = scmp.ne.s32.totalorder %s123, %s124
      %p136 = scmp.eq.s32.totalorder %s30, 1
      %p137 = por %p135, %p136
      %p139 = scmp.ne.s32.totalorder %s124, %s138
      %p140 = scmp.eq.s32.totalorder %s30, 0
      %p141 = por %p139, %p140
      %s143 = sadd.s32 %s142, 1
      %p146 = scmp.eq.s32.totalorder %s24, 1
      %p147 = scmp.ne.s32.totalorder %s142, %s144
      %p148 = scmp.eq.s32.totalorder %s24, 0
      %p149 = por %p147, %p148
      %p150 = scmp.ne.s32.totalorder %s142, %s144
      %p151 = scmp.eq.s32.totalorder %s29, 1
      %p152 = por %p150, %p151
      %p153 = scmp.ne.s32.totalorder %s144, %s145
      %p154 = scmp.eq.s32.totalorder %s29, 0
      %p155 = por %p153, %p154
      %p156 = scmp.ne.s32.totalorder %s144, %s145
      %p157 = scmp.eq.s32.totalorder %s30, 1
      %p158 = por %p156, %p157
      %p160 = scmp.ne.s32.totalorder %s145, %s159
      %p161 = scmp.eq.s32.totalorder %s30, 0
      %p162 = por %p160, %p161
      %s164 = sadd.s32 %s163, 1
      %p167 = scmp.eq.s32.totalorder %s24, 1
      %p168 = scmp.ne.s32.totalorder %s163, %s165
      %p169 = scmp.eq.s32.totalorder %s24, 0
      %p170 = por %p168, %p169
      %p171 = scmp.ne.s32.totalorder %s163, %s165
      %p172 = scmp.eq.s32.totalorder %s29, 1
      %p173 = por %p171, %p172
      %p174 = scmp.ne.s32.totalorder %s165, %s166
      %p175 = scmp.eq.s32.totalorder %s29, 0
      %p176 = por %p174, %p175
      %p177 = scmp.ne.s32.totalorder %s165, %s166
      %p178 = scmp.eq.s32.totalorder %s30, 1
      %p179 = por %p177, %p178
      %p181 = scmp.ne.s32.totalorder %s166, %s180
      %p182 = scmp.eq.s32.totalorder %s30, 0
      %p183 = por %p181, %p182
      %s185 = sadd.s32 %s184, 1
      %p188 = scmp.eq.s32.totalorder %s24, 1
      %p189 = scmp.ne.s32.totalorder %s184, %s186
      %p190 = scmp.eq.s32.totalorder %s24, 0
      %p191 = por %p189, %p190
      %p192 = scmp.ne.s32.totalorder %s184, %s186
      %p193 = scmp.eq.s32.totalorder %s29, 1
      %p194 = por %p192, %p193
      %p195 = scmp.ne.s32.totalorder %s186, %s187
      %p196 = scmp.eq.s32.totalorder %s29, 0
      %p197 = por %p195, %p196
      %p198 = scmp.ne.s32.totalorder %s186, %s187
      %p199 = scmp.eq.s32.totalorder %s30, 1
      %p200 = por %p198, %p199
      %p202 = scmp.ne.s32.totalorder %s187, %s201
      %p203 = scmp.eq.s32.totalorder %s30, 0
      %p204 = por %p202, %p203
      %s206 = sadd.s32 %s205, 1
      %p209 = scmp.eq.s32.totalorder %s24, 1
      %p210 = scmp.ne.s32.totalorder %s205, %s207
      %p211 = scmp.eq.s32.totalorder %s24, 0
      %p212 = por %p210, %p211
      %p213 = scmp.ne.s32.totalorder %s205, %s207
      %p214 = scmp.eq.s32.totalorder %s29, 1
      %p215 = por %p213, %p214
      %p216 = scmp.ne.s32.totalorder %s207, %s208
      %p217 = scmp.eq.s32.totalorder %s29, 0
      %p218 = por %p216, %p217
      %p219 = scmp.ne.s32.totalorder %s207, %s208
      %p220 = scmp.eq.s32.totalorder %s30, 1
      %p221 = por %p219, %p220
      %p223 = scmp.ne.s32.totalorder %s208, %s222
      %p224 = scmp.eq.s32.totalorder %s30, 0
      %p225 = por %p223, %p224
      %s227 = sadd.s32 %s226, 1
      %p230 = scmp.eq.s32.totalorder %s24, 1
      %p231 = scmp.ne.s32.totalorder %s226, %s228
      %p232 = scmp.eq.s32.totalorder %s24, 0
      %p233 = por %p231, %p232
      %p234 = scmp.ne.s32.totalorder %s226, %s228
      %p235 = scmp.eq.s32.totalorder %s29, 1
      %p236 = por %p234, %p235
      %p237 = scmp.ne.s32.totalorder %s228, %s229
      %p238 = scmp.eq.s32.totalorder %s29, 0
      %p239 = por %p237, %p238
      %p240 = scmp.ne.s32.totalorder %s228, %s229
      %p241 = scmp.eq.s32.totalorder %s30, 1
      %p242 = por %p240, %p241
      %p244 = scmp.ne.s32.totalorder %s229, %s243
      %p245 = scmp.eq.s32.totalorder %s30, 0
      %p246 = por %p244, %p245
      %s248 = sadd.s32 %s247, 1
      %p251 = scmp.eq.s32.totalorder %s24, 1
      %p252 = scmp.ne.s32.totalorder %s247, %s249
      %p253 = scmp.eq.s32.totalorder %s24, 0
      %p254 = por %p252, %p253
      %p255 = scmp.ne.s32.totalorder %s247, %s249
      %p256 = scmp.eq.s32.totalorder %s29, 1
      %p257 = por %p255, %p256
      %p258 = scmp.ne.s32.totalorder %s249, %s250
      %p259 = scmp.eq.s32.totalorder %s29, 0
      %p260 = por %p258, %p259
      %p261 = scmp.ne.s32.totalorder %s249, %s250
      %p262 = scmp.eq.s32.totalorder %s30, 1
      %p263 = por %p261, %p262
      %p265 = scmp.ne.s32.totalorder %s250, %s264
      %p266 = scmp.eq.s32.totalorder %s30, 0
      %p267 = por %p265, %p266
      %s268 = ssub.s32 %s24, %s31
      %p269 = scmp.eq.s32.totalorder %s268, 0
      %s271 = sadd.s32 %s270, 1
      %s272 = scalar_select %p269, %s270, %s271
      %p275 = pneg %p269
      %p276 = scmp.eq.s32.totalorder %s24, 1
      %p277 = por %p275, %p276
      %p278 = scmp.ne.s32.totalorder %s270, %s273
      %p279 = scmp.eq.s32.totalorder %s24, 0
      %p280 = por %p278, %p279
      %p281 = scmp.ne.s32.totalorder %s270, %s273
      %p282 = scmp.eq.s32.totalorder %s29, 1
      %p283 = por %p281, %p282
      %p284 = scmp.ne.s32.totalorder %s273, %s274
      %p285 = scmp.eq.s32.totalorder %s29, 0
      %p286 = por %p284, %p285
      %p287 = scmp.ne.s32.totalorder %s273, %s274
      %p288 = scmp.eq.s32.totalorder %s30, 1
      %p289 = por %p287, %p288
      %p291 = scmp.ne.s32.totalorder %s274, %s290
      %p292 = scmp.eq.s32.totalorder %s30, 0
      %p293 = por %p291, %p292
      %p294 = scmp.le.s32.totalorder 1, %s24
      %p295 = scmp.lt.s32.totalorder %s24, 3
      %p296 = pnand %p294, %p295
      %p297 = pneg %p296
      // Predicated region
      $region9: #{_lambda_.1} parent=5 // pred_check
        _
      $region10: #{_lambda_.1} parent=5 // pred_check_branch
        %299 = sbr.rel (%p296) target = $region12
      $region11: #{_lambda_.1} parent=5 // pred_region
        %s300 = ssub.s32 %s24, 1
        // Predicated region
        $region13: #{_lambda_.1} parent=11 // pred_check
          %p301 = pneg %p71
        $region14: #{_lambda_.1} parent=11 // pred_check_branch
          %303 = sbr.rel (%p301) target = $region16
        $region15: #{_lambda_.1} parent=11 // pred_region
          %s305 = ssub.s32 1024, 1024
          %306 = vsyncadd [#allocation6], %s305
          %s307 = sshll.u32 [#allocation5], 4
          %s308 = int_to_ptr.vmem [resolvable:$true] %s307
          %313 = dma.hbm_to_vmem [thread:$0]  %s1, 1024, %s308, [#allocation6], 64, 64, 4
        $region16: #{_lambda_.1} parent=11 // pred_fallthru
          _
        // Predicated region
        $region17: #{_lambda_.1} parent=11 // pred_check
          %p314 = pneg %p92
        $region18: #{_lambda_.1} parent=11 // pred_check_branch
          %316 = sbr.rel (%p314) target = $region20
        $region19: #{_lambda_.1} parent=11 // pred_region
          _
        $region20: #{_lambda_.1} parent=11 // pred_fallthru
          _
        // Predicated region
        $region21: #{_lambda_.1} parent=11 // pred_check
          %p317 = pneg %p113
        $region22: #{_lambda_.1} parent=11 // pred_check_branch
          %319 = sbr.rel (%p317) target = $region24
        $region23: #{_lambda_.1} parent=11 // pred_region
          %s321 = ssub.s32 1024, 1024
          %322 = vsyncadd [#allocation6], %s321
          %s323 = sshll.u32 [#allocation7], 4
          %s324 = int_to_ptr.vmem [resolvable:$true] %s323
          %329 = dma.hbm_to_vmem [thread:$0]  %s3, 1024, %s324, [#allocation6], 64, 64, 4
        $region24: #{_lambda_.1} parent=11 // pred_fallthru
          _
        // Predicated region
        $region25: #{_lambda_.1} parent=11 // pred_check
          %p330 = pneg %p134
        $region26: #{_lambda_.1} parent=11 // pred_check_branch
          %332 = sbr.rel (%p330) target = $region28
        $region27: #{_lambda_.1} parent=11 // pred_region
          _
        $region28: #{_lambda_.1} parent=11 // pred_fallthru
          _
        // Predicated region
        $region29: #{_lambda_.1} parent=11 // pred_check
          %p333 = pneg %p155
        $region30: #{_lambda_.1} parent=11 // pred_check_branch
          %335 = sbr.rel (%p333) target = $region32
        $region31: #{_lambda_.1} parent=11 // pred_region
          %s337 = ssub.s32 1024, 1024
          %338 = vsyncadd [#allocation9], %s337
          %s339 = sshll.u32 [#allocation8], 4
          %s340 = int_to_ptr.vmem [resolvable:$true] %s339
          %345 = dma.hbm_to_vmem [thread:$0]  %s5, 1024, %s340, [#allocation9], 64, 64, 4
        $region32: #{_lambda_.1} parent=11 // pred_fallthru
          _
        // Predicated region
        $region33: #{_lambda_.1} parent=11 // pred_check
          %p346 = pneg %p176
        $region34: #{_lambda_.1} parent=11 // pred_check_branch
          %348 = sbr.rel (%p346) target = $region36
        $region35: #{_lambda_.1} parent=11 // pred_region
          _
        $region36: #{_lambda_.1} parent=11 // pred_fallthru
          _
        // Predicated region
        $region37: #{_lambda_.1} parent=11 // pred_check
          %p349 = pneg %p197
        $region38: #{_lambda_.1} parent=11 // pred_check_branch
          %351 = sbr.rel (%p349) target = $region40
        $region39: #{_lambda_.1} parent=11 // pred_region
          %s353 = ssub.s32 1024, 1024
          %354 = vsyncadd [#allocation9], %s353
          %s355 = sshll.u32 [#allocation10], 4
          %s356 = int_to_ptr.vmem [resolvable:$true] %s355
          %361 = dma.hbm_to_vmem [thread:$0]  %s7, 1024, %s356, [#allocation9], 64, 64, 4
        $region40: #{_lambda_.1} parent=11 // pred_fallthru
          _
        // Predicated region
        $region41: #{_lambda_.1} parent=11 // pred_check
          %p362 = pneg %p218
        $region42: #{_lambda_.1} parent=11 // pred_check_branch
          %364 = sbr.rel (%p362) target = $region44
        $region43: #{_lambda_.1} parent=11 // pred_region
          _
        $region44: #{_lambda_.1} parent=11 // pred_fallthru
          _
        // Predicated region
        $region45: #{_lambda_.1} parent=11 // pred_check
          %p365 = pneg %p239
        $region46: #{_lambda_.1} parent=11 // pred_check_branch
          %367 = sbr.rel (%p365) target = $region48
        $region47: #{_lambda_.1} parent=11 // pred_region
          _
        $region48: #{_lambda_.1} parent=11 // pred_fallthru
          _
        // Predicated region
        $region49: #{_lambda_.1} parent=11 // pred_check
          %p368 = pneg %p260
        $region50: #{_lambda_.1} parent=11 // pred_check_branch
          %370 = sbr.rel (%p368) target = $region52
        $region51: #{_lambda_.1} parent=11 // pred_region
          _
        $region52: #{_lambda_.1} parent=11 // pred_fallthru
          _
      $region12: #{_lambda_.1} parent=5 // pred_fallthru
        _
      %p371 = scmp.lt.s32.totalorder %s24, 2
      // Predicated region
      $region53: #{_lambda_.1} parent=5 // pred_check
        %p372 = pneg %p371
      $region54: #{_lambda_.1} parent=5 // pred_check_branch
        %374 = sbr.rel (%p372) target = $region56
      $region55: #{_lambda_.1} parent=5 // pred_region
        // Predicated region
        $region57: #{_lambda_.1} parent=55 // pred_check
          %p375 = pneg %p44
        $region58: #{_lambda_.1} parent=55 // pred_check_branch
          %377 = sbr.rel (%p375) target = $region60
        $region59: #{_lambda_.1} parent=55 // pred_region
          %s378 = sand.u32 %s34, 1
          %s379 = scalar_lea.sflag [#allocation4], %s378
          %s380 = sand.u32 %s34, 1
          %s381 = smul.addr %s380, 256
          %s382 = scalar_lea.vmem [#allocation3], %s381
          %s383 = smul.u32 32, %s24
          %s384 = ssub.s32 63, %s383
          %p385 = scmp.lt.s32.totalorder %s384, 32
          %s386 = scalar_select %p385, %s384, 32
          %s387 = smul.u32 128, %s386
          %s389 = ssub.s32 4096, %s387
          %390 = vsyncadd %s379, %s389
          %p391 = scmp.ne.s32.totalorder 0, %s387
          %s392 = smul.addr %s383, 128
          %s393 = scalar_lea.hbm %s0, %s392
          %s394 = smul.u32 8, %s386
          %s395 = sshll.u32 %s382, 4
          %s396 = int_to_ptr.vmem [resolvable:$true] %s395
          %s397 = sshll.u32 %s394, 4
          %401 = dma.hbm_to_vmem [thread:$0]  (%p391), %s393, %s397, %s396, %s379, 128, 128, 8
        $region60: #{_lambda_.1} parent=55 // pred_fallthru
          _
      $region56: #{_lambda_.1} parent=5 // pred_fallthru
        _
      %p402 = scmp.le.s32.totalorder 1, %s24
      %p403 = scmp.lt.s32.totalorder %s24, 3
      %p404 = pnand %p402, %p403
      %p405 = pneg %p404
      // Predicated region
      $region61: #{_lambda_.1} parent=5 // pred_check
        _
      $region62: #{_lambda_.1} parent=5 // pred_check_branch
        %407 = sbr.rel (%p404) target = $region64
      $region63: #{_lambda_.1} parent=5 // pred_region
        %s408 = ssub.s32 %s24, 1
        %s409 = sand.u32 %s37, 1
        %s410 = scalar_lea.sflag [#allocation4], %s409
        %s411 = sand.u32 %s37, 1
        %s412 = smul.addr %s411, 256
        %s413 = scalar_lea.vmem [#allocation3], %s412
        // Predicated region
        $region65: #{_lambda_.1} parent=63 // pred_check
          %p414 = pneg %p50
        $region66: #{_lambda_.1} parent=63 // pred_check_branch
          %416 = sbr.rel (%p414) target = $region68
        $region67: #{_lambda_.1} parent=63 // pred_region
          %417 = dma.done %s410, 4096
        $region68: #{_lambda_.1} parent=63 // pred_fallthru
          _
        // Predicated region
        $region69: #{_lambda_.1} parent=63 // pred_check
          %p418 = pneg %p71
        $region70: #{_lambda_.1} parent=63 // pred_check_branch
          %420 = sbr.rel (%p418) target = $region72
        $region71: #{_lambda_.1} parent=63 // pred_region
          %421 = dma.done [#allocation6], 1024
        $region72: #{_lambda_.1} parent=63 // pred_fallthru
          _
        // Predicated region
        $region73: #{_lambda_.1} parent=63 // pred_check
          %p422 = pneg %p113
        $region74: #{_lambda_.1} parent=63 // pred_check_branch
          %424 = sbr.rel (%p422) target = $region76
        $region75: #{_lambda_.1} parent=63 // pred_region
          %425 = dma.done [#allocation6], 1024
        $region76: #{_lambda_.1} parent=63 // pred_fallthru
          _
        // Predicated region
        $region77: #{_lambda_.1} parent=63 // pred_check
          %p426 = pneg %p155
        $region78: #{_lambda_.1} parent=63 // pred_check_branch
          %428 = sbr.rel (%p426) target = $region80
        $region79: #{_lambda_.1} parent=63 // pred_region
          %429 = dma.done [#allocation9], 1024
        $region80: #{_lambda_.1} parent=63 // pred_fallthru
          _
        // Predicated region
        $region81: #{_lambda_.1} parent=63 // pred_check
          %p430 = pneg %p197
        $region82: #{_lambda_.1} parent=63 // pred_check_branch
          %432 = sbr.rel (%p430) target = $region84
        $region83: #{_lambda_.1} parent=63 // pred_region
          %433 = dma.done [#allocation9], 1024
        $region84: #{_lambda_.1} parent=63 // pred_fallthru
          _
        %s434 = sand.u32 %s37, 1
        %s435 = scalar_lea.sflag [#allocation4], %s434
        %s436 = sand.u32 %s37, 1
        %s437 = smul.addr %s436, 256
        %s438 = scalar_lea.vmem [#allocation3], %s437
        %p439 = pneg %p50
        %p440 = pneg %p47
        %p441 = pneg %p71
        %p442 = pneg %p68
        %p443 = pneg %p92
        %p444 = pneg %p89
        %p445 = pneg %p113
        %p446 = pneg %p110
        %p447 = pneg %p134
        %p448 = pneg %p131
        %p449 = pneg %p155
        %p450 = pneg %p152
        %p451 = pneg %p176
        %p452 = pneg %p173
        %p453 = pneg %p197
        %p454 = pneg %p194
        %p455 = pneg %p218
        %p456 = pneg %p215
        %p457 = pneg %p239
        %p458 = pneg %p236
        %p459 = pneg %p260
        %p460 = pneg %p257
        %p461 = pneg %p286
        %p462 = pneg %p283
        %s463 = sand.u32 %s273, 1
        %s464 = sand.u32 %s273, 1
        %s465 = smul.addr %s464, 256
        %s466 = scalar_lea.vmem [#allocation11], %s465
        %s467 = smul.u32 32, %s29
        %s468 = ssub.s32 63, %s467
        %p469 = scmp.lt.s32.totalorder %s468, 32
        %s470 = scalar_select %p469, %s468, 32
        %s471 = smul.u32 128, %s470
        %s472 = smul.u32 32, %s29
        %s473 = ssub.s32 63, %s472
        %p474 = scmp.lt.s32.totalorder %s473, 32
        %s475 = scalar_select %p474, %s473, 32
        %s476 = smul.u32 128, %s475
        %v478 = vld [vmem:[%s413] sm:$0xff]
        %v479 = vld [vmem:[%s413 + $0x8] sm:$0xff]
        %v480 = vld [vmem:[%s413 + $0x10] sm:$0xff]
        %v481 = vld [vmem:[%s413 + $0x18] sm:$0xff]
        %v482 = vld [vmem:[%s413 + $0x20] sm:$0xff]
        %v483 = vld [vmem:[%s413 + $0x28] sm:$0xff]
        %v484 = vld [vmem:[%s413 + $0x30] sm:$0xff]
        %v485 = vld [vmem:[%s413 + $0x38] sm:$0xff]
        %v486 = vld [vmem:[%s413 + $0x40] sm:$0xff]
        %v487 = vld [vmem:[%s413 + $0x48] sm:$0xff]
        %v488 = vld [vmem:[%s413 + $0x50] sm:$0xff]
        %v489 = vld [vmem:[%s413 + $0x58] sm:$0xff]
        %v490 = vld [vmem:[%s413 + $0x60] sm:$0xff]
        %v491 = vld [vmem:[%s413 + $0x68] sm:$0xff]
        %v492 = vld [vmem:[%s413 + $0x70] sm:$0xff]
        %v493 = vld [vmem:[%s413 + $0x78] sm:$0xff]
        %v494 = vld [vmem:[%s413 + $0x80] sm:$0xff]
        %v495 = vld [vmem:[%s413 + $0x88] sm:$0xff]
        %v496 = vld [vmem:[%s413 + $0x90] sm:$0xff]
        %v497 = vld [vmem:[%s413 + $0x98] sm:$0xff]
        %v498 = vld [vmem:[%s413 + $0xa0] sm:$0xff]
        %v499 = vld [vmem:[%s413 + $0xa8] sm:$0xff]
        %v500 = vld [vmem:[%s413 + $0xb0] sm:$0xff]
        %v501 = vld [vmem:[%s413 + $0xb8] sm:$0xff]
        %v502 = vld [vmem:[%s413 + $0xc0] sm:$0xff]
        %v503 = vld [vmem:[%s413 + $0xc8] sm:$0xff]
        %v504 = vld [vmem:[%s413 + $0xd0] sm:$0xff]
        %v505 = vld [vmem:[%s413 + $0xd8] sm:$0xff]
        %v506 = vld [vmem:[%s413 + $0xe0] sm:$0xff]
        %v507 = vld [vmem:[%s413 + $0xe8] sm:$0xff]
        %v508 = vld [vmem:[%s413 + $0xf0] sm:$0xff]
        %v509 = vld [vmem:[%s413 + $0xf8] sm:$0xff]
        %v510 = vpack.c.bf16 %v479, %v478
        %v511 = vpack.c.bf16 %v481, %v480
        %v512 = vpack.c.bf16 %v483, %v482
        %v513 = vpack.c.bf16 %v485, %v484
        %v514 = vpack.c.bf16 %v487, %v486
        %v515 = vpack.c.bf16 %v489, %v488
        %v516 = vpack.c.bf16 %v491, %v490
        %v517 = vpack.c.bf16 %v493, %v492
        %v518 = vld [vmem:[#allocation5] sm:$0xf]
        %v519 = vld [vmem:[#allocation5 + $0x4] sm:$0xf]
        %v520 = vld [vmem:[#allocation5 + $0x8] sm:$0xf]
        %v521 = vld [vmem:[#allocation5 + $0xc] sm:$0xf]
        %v522 = vld [vmem:[#allocation5 + $0x10] sm:$0xf]
        %v523 = vld [vmem:[#allocation5 + $0x14] sm:$0xf]
        %v524 = vld [vmem:[#allocation5 + $0x18] sm:$0xf]
        %v525 = vld [vmem:[#allocation5 + $0x1c] sm:$0xf]
        %v526 = vld [vmem:[#allocation5 + $0x20] sm:$0xf]
        %v527 = vld [vmem:[#allocation5 + $0x24] sm:$0xf]
        %v528 = vld [vmem:[#allocation5 + $0x28] sm:$0xf]
        %v529 = vld [vmem:[#allocation5 + $0x2c] sm:$0xf]
        %v530 = vld [vmem:[#allocation5 + $0x30] sm:$0xf]
        %v531 = vld [vmem:[#allocation5 + $0x34] sm:$0xf]
        %v532 = vld [vmem:[#allocation5 + $0x38] sm:$0xf]
        %v533 = vld [vmem:[#allocation5 + $0x3c] sm:$0xf]
        %v534 = vld [vmem:[%s2] sm:$0x1]
        %v536 = vlaneseq
        %v537 = vshrl.u32 %v536, 7
        %v538 = vsub.s32 0, %v537
        %v539 = vrot.slane %v534, %v538
        %v557 = vunpack.c.l.b16 %v518
        %v558 = vunpack.c.l.b16 %v519
        %v559 = vunpack.c.l.b16 %v520
        %v560 = vunpack.c.l.b16 %v521
        %v561 = vunpack.c.l.b16 %v522
        %v562 = vunpack.c.l.b16 %v523
        %v563 = vunpack.c.l.b16 %v524
        %v564 = vunpack.c.l.b16 %v525
        %v565 = vunpack.c.l.b16 %v526
        %v566 = vunpack.c.l.b16 %v527
        %v567 = vunpack.c.l.b16 %v528
        %v568 = vunpack.c.l.b16 %v529
        %v569 = vunpack.c.l.b16 %v530
        %v570 = vunpack.c.l.b16 %v531
        %v571 = vunpack.c.l.b16 %v532
        %v572 = vunpack.c.l.b16 %v533
        %v573 = vpack.c.b16 %v558, %v557
        %v574 = vpack.c.b16 %v560, %v559
        %v575 = vpack.c.b16 %v562, %v561
        %v576 = vpack.c.b16 %v564, %v563
        %v577 = vpack.c.b16 %v566, %v565
        %v578 = vpack.c.b16 %v568, %v567
        %v579 = vpack.c.b16 %v570, %v569
        %v580 = vpack.c.b16 %v572, %v571
        %589 = vmatprep.subr.bf16.mxu0 0
        %590 = vmatpush1.bf16.msra.mxu0 %v573
        %591 = vmatprep.subr.bf16.mxu0 0
        %592 = vmatpush1.bf16.msra.mxu0 %v574
        %593 = vmatprep.subr.bf16.mxu0 0
        %594 = vmatpush1.bf16.msra.mxu0 %v575
        %595 = vmatprep.subr.bf16.mxu0 0
        %596 = vmatpush1.bf16.msra.mxu0 %v576
        %597 = vmatprep.subr.bf16.mxu0 0
        %598 = vmatpush1.bf16.msra.mxu0 %v577
        %599 = vmatprep.subr.bf16.mxu0 0
        %600 = vmatpush1.bf16.msra.mxu0 %v578
        %601 = vmatprep.subr.bf16.mxu0 0
        %602 = vmatpush1.bf16.msra.mxu0 %v579
        %603 = vmatprep.subr.bf16.mxu0 0
        %604 = vmatpush1.bf16.msra.mxu0 %v580
        %605 = vmatprep.subr.bf16.mxu0 0
        %606 = vmatpush1.bf16.msra.mxu0 0
        %607 = vmatprep.subr.bf16.mxu0 0
        %608 = vmatpush1.bf16.msra.mxu0 0
        %609 = vmatprep.subr.bf16.mxu0 0
        %610 = vmatpush1.bf16.msra.mxu0 0
        %611 = vmatprep.subr.bf16.mxu0 0
        %612 = vmatpush1.bf16.msra.mxu0 0
        %613 = vmatprep.subr.bf16.mxu0 0
        %614 = vmatpush1.bf16.msra.mxu0 0
        %615 = vmatprep.subr.bf16.mxu0 0
        %616 = vmatpush1.bf16.msra.mxu0 0
        %617 = vmatprep.subr.bf16.mxu0 0
        %618 = vmatpush1.bf16.msra.mxu0 0
        %619 = vmatprep.subr.bf16.mxu0 0
        %620 = vmatpush1.bf16.msra.mxu0 0
        %621 = vmatprep.mubr.bf16.mxu0 0
        %622 = vmatmul.mubr.bf16.gmra.mrb[0].mxu0 %v510
        %v623 = vpop.f32.mrb[0].mxu0
        %v624 = vadd.f32 %v539, %v623
        %v625 = vpop.f32.mrb[0].mxu0
        %v626 = vpop.f32.mrb[0].mxu0
        %v627 = vadd.f32 %v539, %v626
        %v628 = vpop.f32.mrb[0].mxu0
        %629 = vmatprep.mubr.bf16.mxu0 0
        %630 = vmatmul.mubr.bf16.gmra.mrb[0].mxu0 %v511
        %v631 = vpop.f32.mrb[0].mxu0
        %v632 = vadd.f32 %v539, %v631
        %v633 = vpop.f32.mrb[0].mxu0
        %v634 = vpop.f32.mrb[0].mxu0
        %v635 = vadd.f32 %v539, %v634
        %v636 = vpop.f32.mrb[0].mxu0
        %637 = vmatprep.mubr.bf16.mxu0 0
        %638 = vmatmul.mubr.bf16.gmra.mrb[0].mxu0 %v512
        %v639 = vpop.f32.mrb[0].mxu0
        %v640 = vadd.f32 %v539, %v639
        %v641 = vpop.f32.mrb[0].mxu0
        %v642 = vpop.f32.mrb[0].mxu0
        %v643 = vadd.f32 %v539, %v642
        %v644 = vpop.f32.mrb[0].mxu0
        %645 = vmatprep.mubr.bf16.mxu0 0
        %646 = vmatmul.mubr.bf16.gmra.mrb[0].mxu0 %v513
        %v647 = vpop.f32.mrb[0].mxu0
        %v648 = vadd.f32 %v539, %v647
        %v649 = vpop.f32.mrb[0].mxu0
        %v650 = vpop.f32.mrb[0].mxu0
        %v651 = vadd.f32 %v539, %v650
        %v652 = vpop.f32.mrb[0].mxu0
        %653 = vmatprep.mubr.bf16.mxu0 0
        %654 = vmatmul.mubr.bf16.gmra.mrb[0].mxu0 %v514
        %v655 = vpop.f32.mrb[0].mxu0
        %v656 = vadd.f32 %v539, %v655
        %v657 = vpop.f32.mrb[0].mxu0
        %v658 = vpop.f32.mrb[0].mxu0
        %v659 = vadd.f32 %v539, %v658
        %v660 = vpop.f32.mrb[0].mxu0
        %661 = vmatprep.mubr.bf16.mxu0 0
        %662 = vmatmul.mubr.bf16.gmra.mrb[0].mxu0 %v515
        %v663 = vpop.f32.mrb[0].mxu0
        %v664 = vadd.f32 %v539, %v663
        %v665 = vpop.f32.mrb[0].mxu0
        %v666 = vpop.f32.mrb[0].mxu0
        %v667 = vadd.f32 %v539, %v666
        %v668 = vpop.f32.mrb[0].mxu0
        %669 = vmatprep.mubr.bf16.mxu0 0
        %670 = vmatmul.mubr.bf16.gmra.mrb[0].mxu0 %v516
        %v671 = vpop.f32.mrb[0].mxu0
        %v672 = vadd.f32 %v539, %v671
        %v673 = vpop.f32.mrb[0].mxu0
        %v674 = vpop.f32.mrb[0].mxu0
        %v675 = vadd.f32 %v539, %v674
        %v676 = vpop.f32.mrb[0].mxu0
        %677 = vmatprep.mubr.bf16.mxu0 0
        %678 = vmatmul.mubr.bf16.gmra.mrb[0].mxu0 %v517
        %v679 = vpop.f32.mrb[0].mxu0
        %v680 = vadd.f32 %v539, %v679
        %v681 = vpop.f32.mrb[0].mxu0
        %v682 = vpop.f32.mrb[0].mxu0
        %v683 = vadd.f32 %v539, %v682
        %v684 = vpop.f32.mrb[0].mxu0
        %685 = vdwg.mxu0
        %vm686 = vcmp.gt.f32.partialorder %v624, 0.0
        %vm687 = vcmp.gt.f32.partialorder %v627, 0.0
        %vm688 = vcmp.gt.f32.partialorder %v632, 0.0
        %vm689 = vcmp.gt.f32.partialorder %v635, 0.0
        %vm690 = vcmp.gt.f32.partialorder %v640, 0.0
        %vm691 = vcmp.gt.f32.partialorder %v643, 0.0
        %vm692 = vcmp.gt.f32.partialorder %v648, 0.0
        %vm693 = vcmp.gt.f32.partialorder %v651, 0.0
        %vm694 = vcmp.gt.f32.partialorder %v656, 0.0
        %vm695 = vcmp.gt.f32.partialorder %v659, 0.0
        %vm696 = vcmp.gt.f32.partialorder %v664, 0.0
        %vm697 = vcmp.gt.f32.partialorder %v667, 0.0
        %vm698 = vcmp.gt.f32.partialorder %v672, 0.0
        %vm699 = vcmp.gt.f32.partialorder %v675, 0.0
        %vm700 = vcmp.gt.f32.partialorder %v680, 0.0
        %vm701 = vcmp.gt.f32.partialorder %v683, 0.0
        %v702 = vmul.f32 %v624, 0.01
        %v703 = vmul.f32 %v627, 0.01
        %v704 = vmul.f32 %v632, 0.01
        %v705 = vmul.f32 %v635, 0.01
        %v706 = vmul.f32 %v640, 0.01
        %v707 = vmul.f32 %v643, 0.01
        %v708 = vmul.f32 %v648, 0.01
        %v709 = vmul.f32 %v651, 0.01
        %v710 = vmul.f32 %v656, 0.01
        %v711 = vmul.f32 %v659, 0.01
        %v712 = vmul.f32 %v664, 0.01
        %v713 = vmul.f32 %v667, 0.01
        %v714 = vmul.f32 %v672, 0.01
        %v715 = vmul.f32 %v675, 0.01
        %v716 = vmul.f32 %v680, 0.01
        %v717 = vmul.f32 %v683, 0.01
        %v718 = vsel %vm686, %v624, %v702
        %v719 = vsel %vm687, %v627, %v703
        %v720 = vsel %vm688, %v632, %v704
        %v721 = vsel %vm689, %v635, %v705
        %v722 = vsel %vm690, %v640, %v706
        %v723 = vsel %vm691, %v643, %v707
        %v724 = vsel %vm692, %v648, %v708
        %v725 = vsel %vm693, %v651, %v709
        %v726 = vsel %vm694, %v656, %v710
        %v727 = vsel %vm695, %v659, %v711
        %v728 = vsel %vm696, %v664, %v712
        %v729 = vsel %vm697, %v667, %v713
        %v730 = vsel %vm698, %v672, %v714
        %v731 = vsel %vm699, %v675, %v715
        %v732 = vsel %vm700, %v680, %v716
        %v733 = vsel %vm701, %v683, %v717
        %v734 = vpack.c.bf16 %v495, %v494
        %v735 = vpack.c.bf16 %v497, %v496
        %v736 = vpack.c.bf16 %v499, %v498
        %v737 = vpack.c.bf16 %v501, %v500
        %v738 = vpack.c.bf16 %v503, %v502
        %v739 = vpack.c.bf16 %v505, %v504
        %v740 = vpack.c.bf16 %v507, %v506
        %v741 = vpack.c.bf16 %v509, %v508
        %742 = vmatprep.subr.bf16.mxu0 0
        %743 = vmatpush1.bf16.msra.mxu0 %v573
        %744 = vmatprep.subr.bf16.mxu0 0
        %745 = vmatpush1.bf16.msra.mxu0 %v574
        %746 = vmatprep.subr.bf16.mxu0 0
        %747 = vmatpush1.bf16.msra.mxu0 %v575
        %748 = vmatprep.subr.bf16.mxu0 0
        %749 = vmatpush1.bf16.msra.mxu0 %v576
        %750 = vmatprep.subr.bf16.mxu0 0
        %751 = vmatpush1.bf16.msra.mxu0 %v577
        %752 = vmatprep.subr.bf16.mxu0 0
        %753 = vmatpush1.bf16.msra.mxu0 %v578
        %754 = vmatprep.subr.bf16.mxu0 0
        %755 = vmatpush1.bf16.msra.mxu0 %v579
        %756 = vmatprep.subr.bf16.mxu0 0
        %757 = vmatpush1.bf16.msra.mxu0 %v580
        %758 = vmatprep.subr.bf16.mxu0 0
        %759 = vmatpush1.bf16.msra.mxu0 0
        %760 = vmatprep.subr.bf16.mxu0 0
        %761 = vmatpush1.bf16.msra.mxu0 0
        %762 = vmatprep.subr.bf16.mxu0 0
        %763 = vmatpush1.bf16.msra.mxu0 0
        %764 = vmatprep.subr.bf16.mxu0 0
        %765 = vmatpush1.bf16.msra.mxu0 0
        %766 = vmatprep.subr.bf16.mxu0 0
        %767 = vmatpush1.bf16.msra.mxu0 0
        %768 = vmatprep.subr.bf16.mxu0 0
        %769 = vmatpush1.bf16.msra.mxu0 0
        %770 = vmatprep.subr.bf16.mxu0 0
        %771 = vmatpush1.bf16.msra.mxu0 0
        %772 = vmatprep.subr.bf16.mxu0 0
        %773 = vmatpush1.bf16.msra.mxu0 0
        %774 = vmatprep.mubr.bf16.mxu0 0
        %775 = vmatmul.mubr.bf16.gmra.mrb[0].mxu0 %v734
        %v776 = vpop.f32.mrb[0].mxu0
        %v777 = vadd.f32 %v539, %v776
        %v778 = vpop.f32.mrb[0].mxu0
        %v779 = vpop.f32.mrb[0].mxu0
        %v780 = vadd.f32 %v539, %v779
        %v781 = vpop.f32.mrb[0].mxu0
        %782 = vmatprep.mubr.bf16.mxu0 0
        %783 = vmatmul.mubr.bf16.gmra.mrb[0].mxu0 %v735
        %v784 = vpop.f32.mrb[0].mxu0
        %v785 = vadd.f32 %v539, %v784
        %v786 = vpop.f32.mrb[0].mxu0
        %v787 = vpop.f32.mrb[0].mxu0
        %v788 = vadd.f32 %v539, %v787
        %v789 = vpop.f32.mrb[0].mxu0
        %790 = vmatprep.mubr.bf16.mxu0 0
        %791 = vmatmul.mubr.bf16.gmra.mrb[0].mxu0 %v736
        %v792 = vpop.f32.mrb[0].mxu0
        %v793 = vadd.f32 %v539, %v792
        %v794 = vpop.f32.mrb[0].mxu0
        %v795 = vpop.f32.mrb[0].mxu0
        %v796 = vadd.f32 %v539, %v795
        %v797 = vpop.f32.mrb[0].mxu0
        %798 = vmatprep.mubr.bf16.mxu0 0
        %799 = vmatmul.mubr.bf16.gmra.mrb[0].mxu0 %v737
        %v800 = vpop.f32.mrb[0].mxu0
        %v801 = vadd.f32 %v539, %v800
        %v802 = vpop.f32.mrb[0].mxu0
        %v803 = vpop.f32.mrb[0].mxu0
        %v804 = vadd.f32 %v539, %v803
        %v805 = vpop.f32.mrb[0].mxu0
        %806 = vmatprep.mubr.bf16.mxu0 0
        %807 = vmatmul.mubr.bf16.gmra.mrb[0].mxu0 %v738
        %v808 = vpop.f32.mrb[0].mxu0
        %v809 = vadd.f32 %v539, %v808
        %v810 = vpop.f32.mrb[0].mxu0
        %v811 = vpop.f32.mrb[0].mxu0
        %v812 = vadd.f32 %v539, %v811
        %v813 = vpop.f32.mrb[0].mxu0
        %814 = vmatprep.mubr.bf16.mxu0 0
        %815 = vmatmul.mubr.bf16.gmra.mrb[0].mxu0 %v739
        %v816 = vpop.f32.mrb[0].mxu0
        %v817 = vadd.f32 %v539, %v816
        %v818 = vpop.f32.mrb[0].mxu0
        %v819 = vpop.f32.mrb[0].mxu0
        %v820 = vadd.f32 %v539, %v819
        %v821 = vpop.f32.mrb[0].mxu0
        %822 = vmatprep.mubr.bf16.mxu0 0
        %823 = vmatmul.mubr.bf16.gmra.mrb[0].mxu0 %v740
        %v824 = vpop.f32.mrb[0].mxu0
        %v825 = vadd.f32 %v539, %v824
        %v826 = vpop.f32.mrb[0].mxu0
        %v827 = vpop.f32.mrb[0].mxu0
        %v828 = vadd.f32 %v539, %v827
        %v829 = vpop.f32.mrb[0].mxu0
        %830 = vmatprep.mubr.bf16.mxu0 0
        %831 = vmatmul.mubr.bf16.gmra.mrb[0].mxu0 %v741
        %v832 = vpop.f32.mrb[0].mxu0
        %v833 = vadd.f32 %v539, %v832
        %v834 = vpop.f32.mrb[0].mxu0
        %v835 = vpop.f32.mrb[0].mxu0
        %v836 = vadd.f32 %v539, %v835
        %v837 = vpop.f32.mrb[0].mxu0
        %838 = vdwg.mxu0
        %vm839 = vcmp.gt.f32.partialorder %v777, 0.0
        %vm840 = vcmp.gt.f32.partialorder %v780, 0.0
        %vm841 = vcmp.gt.f32.partialorder %v785, 0.0
        %vm842 = vcmp.gt.f32.partialorder %v788, 0.0
        %vm843 = vcmp.gt.f32.partialorder %v793, 0.0
        %vm844 = vcmp.gt.f32.partialorder %v796, 0.0
        %vm845 = vcmp.gt.f32.partialorder %v801, 0.0
        %vm846 = vcmp.gt.f32.partialorder %v804, 0.0
        %vm847 = vcmp.gt.f32.partialorder %v809, 0.0
        %vm848 = vcmp.gt.f32.partialorder %v812, 0.0
        %vm849 = vcmp.gt.f32.partialorder %v817, 0.0
        %vm850 = vcmp.gt.f32.partialorder %v820, 0.0
        %vm851 = vcmp.gt.f32.partialorder %v825, 0.0
        %vm852 = vcmp.gt.f32.partialorder %v828, 0.0
        %vm853 = vcmp.gt.f32.partialorder %v833, 0.0
        %vm854 = vcmp.gt.f32.partialorder %v836, 0.0
        %v855 = vmul.f32 %v777, 0.01
        %v856 = vmul.f32 %v780, 0.01
        %v857 = vmul.f32 %v785, 0.01
        %v858 = vmul.f32 %v788, 0.01
        %v859 = vmul.f32 %v793, 0.01
        %v860 = vmul.f32 %v796, 0.01
        %v861 = vmul.f32 %v801, 0.01
        %v862 = vmul.f32 %v804, 0.01
        %v863 = vmul.f32 %v809, 0.01
        %v864 = vmul.f32 %v812, 0.01
        %v865 = vmul.f32 %v817, 0.01
        %v866 = vmul.f32 %v820, 0.01
        %v867 = vmul.f32 %v825, 0.01
        %v868 = vmul.f32 %v828, 0.01
        %v869 = vmul.f32 %v833, 0.01
        %v870 = vmul.f32 %v836, 0.01
        %v871 = vsel %vm839, %v777, %v855
        %v872 = vsel %vm840, %v780, %v856
        %v873 = vsel %vm841, %v785, %v857
        %v874 = vsel %vm842, %v788, %v858
        %v875 = vsel %vm843, %v793, %v859
        %v876 = vsel %vm844, %v796, %v860
        %v877 = vsel %vm845, %v801, %v861
        %v878 = vsel %vm846, %v804, %v862
        %v879 = vsel %vm847, %v809, %v863
        %v880 = vsel %vm848, %v812, %v864
        %v881 = vsel %vm849, %v817, %v865
        %v882 = vsel %vm850, %v820, %v866
        %v883 = vsel %vm851, %v825, %v867
        %v884 = vsel %vm852, %v828, %v868
        %v885 = vsel %vm853, %v833, %v869
        %v886 = vsel %vm854, %v836, %v870
        %v887 = vpack.c.bf16 %v719, %v718
        %v888 = vpack.c.bf16 %v721, %v720
        %v889 = vpack.c.bf16 %v723, %v722
        %v890 = vpack.c.bf16 %v725, %v724
        %v891 = vpack.c.bf16 %v727, %v726
        %v892 = vpack.c.bf16 %v729, %v728
        %v893 = vpack.c.bf16 %v731, %v730
        %v894 = vpack.c.bf16 %v733, %v732
        %v895 = vld [vmem:[#allocation7] sm:$0xf]
        %v896 = vld [vmem:[#allocation7 + $0x4] sm:$0xf]
        %v897 = vld [vmem:[#allocation7 + $0x8] sm:$0xf]
        %v898 = vld [vmem:[#allocation7 + $0xc] sm:$0xf]
        %v899 = vld [vmem:[#allocation7 + $0x10] sm:$0xf]
        %v900 = vld [vmem:[#allocation7 + $0x14] sm:$0xf]
        %v901 = vld [vmem:[#allocation7 + $0x18] sm:$0xf]
        %v902 = vld [vmem:[#allocation7 + $0x1c] sm:$0xf]
        %v903 = vld [vmem:[#allocation7 + $0x20] sm:$0xf]
        %v904 = vld [vmem:[#allocation7 + $0x24] sm:$0xf]
        %v905 = vld [vmem:[#allocation7 + $0x28] sm:$0xf]
        %v906 = vld [vmem:[#allocation7 + $0x2c] sm:$0xf]
        %v907 = vld [vmem:[#allocation7 + $0x30] sm:$0xf]
        %v908 = vld [vmem:[#allocation7 + $0x34] sm:$0xf]
        %v909 = vld [vmem:[#allocation7 + $0x38] sm:$0xf]
        %v910 = vld [vmem:[#allocation7 + $0x3c] sm:$0xf]
        %v911 = vld [vmem:[%s4] sm:$0x1]
        %v913 = vlaneseq
        %v914 = vshrl.u32 %v913, 7
        %v915 = vsub.s32 0, %v914
        %v916 = vrot.slane %v911, %v915
        %v934 = vunpack.c.l.b16 %v895
        %v935 = vunpack.c.l.b16 %v896
        %v936 = vunpack.c.l.b16 %v897
        %v937 = vunpack.c.l.b16 %v898
        %v938 = vunpack.c.l.b16 %v899
        %v939 = vunpack.c.l.b16 %v900
        %v940 = vunpack.c.l.b16 %v901
        %v941 = vunpack.c.l.b16 %v902
        %v942 = vunpack.c.l.b16 %v903
        %v943 = vunpack.c.l.b16 %v904
        %v944 = vunpack.c.l.b16 %v905
        %v945 = vunpack.c.l.b16 %v906
        %v946 = vunpack.c.l.b16 %v907
        %v947 = vunpack.c.l.b16 %v908
        %v948 = vunpack.c.l.b16 %v909
        %v949 = vunpack.c.l.b16 %v910
        %v950 = vpack.c.b16 %v935, %v934
        %v951 = vpack.c.b16 %v937, %v936
        %v952 = vpack.c.b16 %v939, %v938
        %v953 = vpack.c.b16 %v941, %v940
        %v954 = vpack.c.b16 %v943, %v942
        %v955 = vpack.c.b16 %v945, %v944
        %v956 = vpack.c.b16 %v947, %v946
        %v957 = vpack.c.b16 %v949, %v948
        %966 = vmatprep.subr.bf16.mxu0 0
        %967 = vmatpush1.bf16.msra.mxu0 %v950
        %968 = vmatprep.subr.bf16.mxu0 0
        %969 = vmatpush1.bf16.msra.mxu0 %v951
        %970 = vmatprep.subr.bf16.mxu0 0
        %971 = vmatpush1.bf16.msra.mxu0 %v952
        %972 = vmatprep.subr.bf16.mxu0 0
        %973 = vmatpush1.bf16.msra.mxu0 %v953
        %974 = vmatprep.subr.bf16.mxu0 0
        %975 = vmatpush1.bf16.msra.mxu0 %v954
        %976 = vmatprep.subr.bf16.mxu0 0
        %977 = vmatpush1.bf16.msra.mxu0 %v955
        %978 = vmatprep.subr.bf16.mxu0 0
        %979 = vmatpush1.bf16.msra.mxu0 %v956
        %980 = vmatprep.subr.bf16.mxu0 0
        %981 = vmatpush1.bf16.msra.mxu0 %v957
        %982 = vmatprep.subr.bf16.mxu0 0
        %983 = vmatpush1.bf16.msra.mxu0 0
        %984 = vmatprep.subr.bf16.mxu0 0
        %985 = vmatpush1.bf16.msra.mxu0 0
        %986 = vmatprep.subr.bf16.mxu0 0
        %987 = vmatpush1.bf16.msra.mxu0 0
        %988 = vmatprep.subr.bf16.mxu0 0
        %989 = vmatpush1.bf16.msra.mxu0 0
        %990 = vmatprep.subr.bf16.mxu0 0
        %991 = vmatpush1.bf16.msra.mxu0 0
        %992 = vmatprep.subr.bf16.mxu0 0
        %993 = vmatpush1.bf16.msra.mxu0 0
        %994 = vmatprep.subr.bf16.mxu0 0
        %995 = vmatpush1.bf16.msra.mxu0 0
        %996 = vmatprep.subr.bf16.mxu0 0
        %997 = vmatpush1.bf16.msra.mxu0 0
        %998 = vmatprep.mubr.bf16.mxu0 0
        %999 = vmatmul.mubr.bf16.gmra.mrb[0].mxu0 %v887
        %v1000 = vpop.f32.mrb[0].mxu0
        %v1001 = vadd.f32 %v916, %v1000
        %v1002 = vpop.f32.mrb[0].mxu0
        %v1003 = vpop.f32.mrb[0].mxu0
        %v1004 = vadd.f32 %v916, %v1003
        %v1005 = vpop.f32.mrb[0].mxu0
        %1006 = vmatprep.mubr.bf16.mxu0 0
        %1007 = vmatmul.mubr.bf16.gmra.mrb[0].mxu0 %v888
        %v1008 = vpop.f32.mrb[0].mxu0
        %v1009 = vadd.f32 %v916, %v1008
        %v1010 = vpop.f32.mrb[0].mxu0
        %v1011 = vpop.f32.mrb[0].mxu0
        %v1012 = vadd.f32 %v916, %v1011
        %v1013 = vpop.f32.mrb[0].mxu0
        %1014 = vmatprep.mubr.bf16.mxu0 0
        %1015 = vmatmul.mubr.bf16.gmra.mrb[0].mxu0 %v889
        %v1016 = vpop.f32.mrb[0].mxu0
        %v1017 = vadd.f32 %v916, %v1016
        %v1018 = vpop.f32.mrb[0].mxu0
        %v1019 = vpop.f32.mrb[0].mxu0
        %v1020 = vadd.f32 %v916, %v1019
        %v1021 = vpop.f32.mrb[0].mxu0
        %1022 = vmatprep.mubr.bf16.mxu0 0
        %1023 = vmatmul.mubr.bf16.gmra.mrb[0].mxu0 %v890
        %v1024 = vpop.f32.mrb[0].mxu0
        %v1025 = vadd.f32 %v916, %v1024
        %v1026 = vpop.f32.mrb[0].mxu0
        %v1027 = vpop.f32.mrb[0].mxu0
        %v1028 = vadd.f32 %v916, %v1027
        %v1029 = vpop.f32.mrb[0].mxu0
        %1030 = vmatprep.mubr.bf16.mxu0 0
        %1031 = vmatmul.mubr.bf16.gmra.mrb[0].mxu0 %v891
        %v1032 = vpop.f32.mrb[0].mxu0
        %v1033 = vadd.f32 %v916, %v1032
        %v1034 = vpop.f32.mrb[0].mxu0
        %v1035 = vpop.f32.mrb[0].mxu0
        %v1036 = vadd.f32 %v916, %v1035
        %v1037 = vpop.f32.mrb[0].mxu0
        %1038 = vmatprep.mubr.bf16.mxu0 0
        %1039 = vmatmul.mubr.bf16.gmra.mrb[0].mxu0 %v892
        %v1040 = vpop.f32.mrb[0].mxu0
        %v1041 = vadd.f32 %v916, %v1040
        %v1042 = vpop.f32.mrb[0].mxu0
        %v1043 = vpop.f32.mrb[0].mxu0
        %v1044 = vadd.f32 %v916, %v1043
        %v1045 = vpop.f32.mrb[0].mxu0
        %1046 = vmatprep.mubr.bf16.mxu0 0
        %1047 = vmatmul.mubr.bf16.gmra.mrb[0].mxu0 %v893
        %v1048 = vpop.f32.mrb[0].mxu0
        %v1049 = vadd.f32 %v916, %v1048
        %v1050 = vpop.f32.mrb[0].mxu0
        %v1051 = vpop.f32.mrb[0].mxu0
        %v1052 = vadd.f32 %v916, %v1051
        %v1053 = vpop.f32.mrb[0].mxu0
        %1054 = vmatprep.mubr.bf16.mxu0 0
        %1055 = vmatmul.mubr.bf16.gmra.mrb[0].mxu0 %v894
        %v1056 = vpop.f32.mrb[0].mxu0
        %v1057 = vadd.f32 %v916, %v1056
        %v1058 = vpop.f32.mrb[0].mxu0
        %v1059 = vpop.f32.mrb[0].mxu0
        %v1060 = vadd.f32 %v916, %v1059
        %v1061 = vpop.f32.mrb[0].mxu0
        %1062 = vdwg.mxu0
        %vm1063 = vcmp.gt.f32.partialorder %v1001, 0.0
        %vm1064 = vcmp.gt.f32.partialorder %v1004, 0.0
        %vm1065 = vcmp.gt.f32.partialorder %v1009, 0.0
        %vm1066 = vcmp.gt.f32.partialorder %v1012, 0.0
        %vm1067 = vcmp.gt.f32.partialorder %v1017, 0.0
        %vm1068 = vcmp.gt.f32.partialorder %v1020, 0.0
        %vm1069 = vcmp.gt.f32.partialorder %v1025, 0.0
        %vm1070 = vcmp.gt.f32.partialorder %v1028, 0.0
        %vm1071 = vcmp.gt.f32.partialorder %v1033, 0.0
        %vm1072 = vcmp.gt.f32.partialorder %v1036, 0.0
        %vm1073 = vcmp.gt.f32.partialorder %v1041, 0.0
        %vm1074 = vcmp.gt.f32.partialorder %v1044, 0.0
        %vm1075 = vcmp.gt.f32.partialorder %v1049, 0.0
        %vm1076 = vcmp.gt.f32.partialorder %v1052, 0.0
        %vm1077 = vcmp.gt.f32.partialorder %v1057, 0.0
        %vm1078 = vcmp.gt.f32.partialorder %v1060, 0.0
        %v1079 = vmul.f32 %v1001, 0.01
        %v1080 = vmul.f32 %v1004, 0.01
        %v1081 = vmul.f32 %v1009, 0.01
        %v1082 = vmul.f32 %v1012, 0.01
        %v1083 = vmul.f32 %v1017, 0.01
        %v1084 = vmul.f32 %v1020, 0.01
        %v1085 = vmul.f32 %v1025, 0.01
        %v1086 = vmul.f32 %v1028, 0.01
        %v1087 = vmul.f32 %v1033, 0.01
        %v1088 = vmul.f32 %v1036, 0.01
        %v1089 = vmul.f32 %v1041, 0.01
        %v1090 = vmul.f32 %v1044, 0.01
        %v1091 = vmul.f32 %v1049, 0.01
        %v1092 = vmul.f32 %v1052, 0.01
        %v1093 = vmul.f32 %v1057, 0.01
        %v1094 = vmul.f32 %v1060, 0.01
        %v1095 = vsel %vm1063, %v1001, %v1079
        %v1096 = vsel %vm1064, %v1004, %v1080
        %v1097 = vsel %vm1065, %v1009, %v1081
        %v1098 = vsel %vm1066, %v1012, %v1082
        %v1099 = vsel %vm1067, %v1017, %v1083
        %v1100 = vsel %vm1068, %v1020, %v1084
        %v1101 = vsel %vm1069, %v1025, %v1085
        %v1102 = vsel %vm1070, %v1028, %v1086
        %v1103 = vsel %vm1071, %v1033, %v1087
        %v1104 = vsel %vm1072, %v1036, %v1088
        %v1105 = vsel %vm1073, %v1041, %v1089
        %v1106 = vsel %vm1074, %v1044, %v1090
        %v1107 = vsel %vm1075, %v1049, %v1091
        %v1108 = vsel %vm1076, %v1052, %v1092
        %v1109 = vsel %vm1077, %v1057, %v1093
        %v1110 = vsel %vm1078, %v1060, %v1094
        %v1111 = vpack.c.bf16 %v872, %v871
        %v1112 = vpack.c.bf16 %v874, %v873
        %v1113 = vpack.c.bf16 %v876, %v875
        %v1114 = vpack.c.bf16 %v878, %v877
        %v1115 = vpack.c.bf16 %v880, %v879
        %v1116 = vpack.c.bf16 %v882, %v881
        %v1117 = vpack.c.bf16 %v884, %v883
        %v1118 = vpack.c.bf16 %v886, %v885
        %1119 = vmatprep.subr.bf16.mxu0 0
        %1120 = vmatpush1.bf16.msra.mxu0 %v950
        %1121 = vmatprep.subr.bf16.mxu0 0
        %1122 = vmatpush1.bf16.msra.mxu0 %v951
        %1123 = vmatprep.subr.bf16.mxu0 0
        %1124 = vmatpush1.bf16.msra.mxu0 %v952
        %1125 = vmatprep.subr.bf16.mxu0 0
        %1126 = vmatpush1.bf16.msra.mxu0 %v953
        %1127 = vmatprep.subr.bf16.mxu0 0
        %1128 = vmatpush1.bf16.msra.mxu0 %v954
        %1129 = vmatprep.subr.bf16.mxu0 0
        %1130 = vmatpush1.bf16.msra.mxu0 %v955
        %1131 = vmatprep.subr.bf16.mxu0 0
        %1132 = vmatpush1.bf16.msra.mxu0 %v956
        %1133 = vmatprep.subr.bf16.mxu0 0
        %1134 = vmatpush1.bf16.msra.mxu0 %v957
        %1135 = vmatprep.subr.bf16.mxu0 0
        %1136 = vmatpush1.bf16.msra.mxu0 0
        %1137 = vmatprep.subr.bf16.mxu0 0
        %1138 = vmatpush1.bf16.msra.mxu0 0
        %1139 = vmatprep.subr.bf16.mxu0 0
        %1140 = vmatpush1.bf16.msra.mxu0 0
        %1141 = vmatprep.subr.bf16.mxu0 0
        %1142 = vmatpush1.bf16.msra.mxu0 0
        %1143 = vmatprep.subr.bf16.mxu0 0
        %1144 = vmatpush1.bf16.msra.mxu0 0
        %1145 = vmatprep.subr.bf16.mxu0 0
        %1146 = vmatpush1.bf16.msra.mxu0 0
        %1147 = vmatprep.subr.bf16.mxu0 0
        %1148 = vmatpush1.bf16.msra.mxu0 0
        %1149 = vmatprep.subr.bf16.mxu0 0
        %1150 = vmatpush1.bf16.msra.mxu0 0
        %1151 = vmatprep.mubr.bf16.mxu0 0
        %1152 = vmatmul.mubr.bf16.gmra.mrb[0].mxu0 %v1111
        %v1153 = vpop.f32.mrb[0].mxu0
        %v1154 = vadd.f32 %v916, %v1153
        %v1155 = vpop.f32.mrb[0].mxu0
        %v1156 = vpop.f32.mrb[0].mxu0
        %v1157 = vadd.f32 %v916, %v1156
        %v1158 = vpop.f32.mrb[0].mxu0
        %1159 = vmatprep.mubr.bf16.mxu0 0
        %1160 = vmatmul.mubr.bf16.gmra.mrb[0].mxu0 %v1112
        %v1161 = vpop.f32.mrb[0].mxu0
        %v1162 = vadd.f32 %v916, %v1161
        %v1163 = vpop.f32.mrb[0].mxu0
        %v1164 = vpop.f32.mrb[0].mxu0
        %v1165 = vadd.f32 %v916, %v1164
        %v1166 = vpop.f32.mrb[0].mxu0
        %1167 = vmatprep.mubr.bf16.mxu0 0
        %1168 = vmatmul.mubr.bf16.gmra.mrb[0].mxu0 %v1113
        %v1169 = vpop.f32.mrb[0].mxu0
        %v1170 = vadd.f32 %v916, %v1169
        %v1171 = vpop.f32.mrb[0].mxu0
        %v1172 = vpop.f32.mrb[0].mxu0
        %v1173 = vadd.f32 %v916, %v1172
        %v1174 = vpop.f32.mrb[0].mxu0
        %1175 = vmatprep.mubr.bf16.mxu0 0
        %1176 = vmatmul.mubr.bf16.gmra.mrb[0].mxu0 %v1114
        %v1177 = vpop.f32.mrb[0].mxu0
        %v1178 = vadd.f32 %v916, %v1177
        %v1179 = vpop.f32.mrb[0].mxu0
        %v1180 = vpop.f32.mrb[0].mxu0
        %v1181 = vadd.f32 %v916, %v1180
        %v1182 = vpop.f32.mrb[0].mxu0
        %1183 = vmatprep.mubr.bf16.mxu0 0
        %1184 = vmatmul.mubr.bf16.gmra.mrb[0].mxu0 %v1115
        %v1185 = vpop.f32.mrb[0].mxu0
        %v1186 = vadd.f32 %v916, %v1185
        %v1187 = vpop.f32.mrb[0].mxu0
        %v1188 = vpop.f32.mrb[0].mxu0
        %v1189 = vadd.f32 %v916, %v1188
        %v1190 = vpop.f32.mrb[0].mxu0
        %1191 = vmatprep.mubr.bf16.mxu0 0
        %1192 = vmatmul.mubr.bf16.gmra.mrb[0].mxu0 %v1116
        %v1193 = vpop.f32.mrb[0].mxu0
        %v1194 = vadd.f32 %v916, %v1193
        %v1195 = vpop.f32.mrb[0].mxu0
        %v1196 = vpop.f32.mrb[0].mxu0
        %v1197 = vadd.f32 %v916, %v1196
        %v1198 = vpop.f32.mrb[0].mxu0
        %1199 = vmatprep.mubr.bf16.mxu0 0
        %1200 = vmatmul.mubr.bf16.gmra.mrb[0].mxu0 %v1117
        %v1201 = vpop.f32.mrb[0].mxu0
        %v1202 = vadd.f32 %v916, %v1201
        %v1203 = vpop.f32.mrb[0].mxu0
        %v1204 = vpop.f32.mrb[0].mxu0
        %v1205 = vadd.f32 %v916, %v1204
        %v1206 = vpop.f32.mrb[0].mxu0
        %1207 = vmatprep.mubr.bf16.mxu0 0
        %1208 = vmatmul.mubr.bf16.gmra.mrb[0].mxu0 %v1118
        %v1209 = vpop.f32.mrb[0].mxu0
        %v1210 = vadd.f32 %v916, %v1209
        %v1211 = vpop.f32.mrb[0].mxu0
        %v1212 = vpop.f32.mrb[0].mxu0
        %v1213 = vadd.f32 %v916, %v1212
        %v1214 = vpop.f32.mrb[0].mxu0
        %1215 = vdwg.mxu0
        %vm1216 = vcmp.gt.f32.partialorder %v1154, 0.0
        %vm1217 = vcmp.gt.f32.partialorder %v1157, 0.0
        %vm1218 = vcmp.gt.f32.partialorder %v1162, 0.0
        %vm1219 = vcmp.gt.f32.partialorder %v1165, 0.0
        %vm1220 = vcmp.gt.f32.partialorder %v1170, 0.0
        %vm1221 = vcmp.gt.f32.partialorder %v1173, 0.0
        %vm1222 = vcmp.gt.f32.partialorder %v1178, 0.0
        %vm1223 = vcmp.gt.f32.partialorder %v1181, 0.0
        %vm1224 = vcmp.gt.f32.partialorder %v1186, 0.0
        %vm1225 = vcmp.gt.f32.partialorder %v1189, 0.0
        %vm1226 = vcmp.gt.f32.partialorder %v1194, 0.0
        %vm1227 = vcmp.gt.f32.partialorder %v1197, 0.0
        %vm1228 = vcmp.gt.f32.partialorder %v1202, 0.0
        %vm1229 = vcmp.gt.f32.partialorder %v1205, 0.0
        %vm1230 = vcmp.gt.f32.partialorder %v1210, 0.0
        %vm1231 = vcmp.gt.f32.partialorder %v1213, 0.0
        %v1232 = vmul.f32 %v1154, 0.01
        %v1233 = vmul.f32 %v1157, 0.01
        %v1234 = vmul.f32 %v1162, 0.01
        %v1235 = vmul.f32 %v1165, 0.01
        %v1236 = vmul.f32 %v1170, 0.01
        %v1237 = vmul.f32 %v1173, 0.01
        %v1238 = vmul.f32 %v1178, 0.01
        %v1239 = vmul.f32 %v1181, 0.01
        %v1240 = vmul.f32 %v1186, 0.01
        %v1241 = vmul.f32 %v1189, 0.01
        %v1242 = vmul.f32 %v1194, 0.01
        %v1243 = vmul.f32 %v1197, 0.01
        %v1244 = vmul.f32 %v1202, 0.01
        %v1245 = vmul.f32 %v1205, 0.01
        %v1246 = vmul.f32 %v1210, 0.01
        %v1247 = vmul.f32 %v1213, 0.01
        %v1248 = vsel %vm1216, %v1154, %v1232
        %v1249 = vsel %vm1217, %v1157, %v1233
        %v1250 = vsel %vm1218, %v1162, %v1234
        %v1251 = vsel %vm1219, %v1165, %v1235
        %v1252 = vsel %vm1220, %v1170, %v1236
        %v1253 = vsel %vm1221, %v1173, %v1237
        %v1254 = vsel %vm1222, %v1178, %v1238
        %v1255 = vsel %vm1223, %v1181, %v1239
        %v1256 = vsel %vm1224, %v1186, %v1240
        %v1257 = vsel %vm1225, %v1189, %v1241
        %v1258 = vsel %vm1226, %v1194, %v1242
        %v1259 = vsel %vm1227, %v1197, %v1243
        %v1260 = vsel %vm1228, %v1202, %v1244
        %v1261 = vsel %vm1229, %v1205, %v1245
        %v1262 = vsel %vm1230, %v1210, %v1246
        %v1263 = vsel %vm1231, %v1213, %v1247
        %v1264 = vpack.c.bf16 %v1096, %v1095
        %v1265 = vpack.c.bf16 %v1098, %v1097
        %v1266 = vpack.c.bf16 %v1100, %v1099
        %v1267 = vpack.c.bf16 %v1102, %v1101
        %v1268 = vpack.c.bf16 %v1104, %v1103
        %v1269 = vpack.c.bf16 %v1106, %v1105
        %v1270 = vpack.c.bf16 %v1108, %v1107
        %v1271 = vpack.c.bf16 %v1110, %v1109
        %v1272 = vld [vmem:[#allocation8] sm:$0xf]
        %v1273 = vld [vmem:[#allocation8 + $0x4] sm:$0xf]
        %v1274 = vld [vmem:[#allocation8 + $0x8] sm:$0xf]
        %v1275 = vld [vmem:[#allocation8 + $0xc] sm:$0xf]
        %v1276 = vld [vmem:[#allocation8 + $0x10] sm:$0xf]
        %v1277 = vld [vmem:[#allocation8 + $0x14] sm:$0xf]
        %v1278 = vld [vmem:[#allocation8 + $0x18] sm:$0xf]
        %v1279 = vld [vmem:[#allocation8 + $0x1c] sm:$0xf]
        %v1280 = vld [vmem:[#allocation8 + $0x20] sm:$0xf]
        %v1281 = vld [vmem:[#allocation8 + $0x24] sm:$0xf]
        %v1282 = vld [vmem:[#allocation8 + $0x28] sm:$0xf]
        %v1283 = vld [vmem:[#allocation8 + $0x2c] sm:$0xf]
        %v1284 = vld [vmem:[#allocation8 + $0x30] sm:$0xf]
        %v1285 = vld [vmem:[#allocation8 + $0x34] sm:$0xf]
        %v1286 = vld [vmem:[#allocation8 + $0x38] sm:$0xf]
        %v1287 = vld [vmem:[#allocation8 + $0x3c] sm:$0xf]
        %v1288 = vld [vmem:[%s6] sm:$0x1]
        %v1290 = vlaneseq
        %v1291 = vshrl.u32 %v1290, 7
        %v1292 = vsub.s32 0, %v1291
        %v1293 = vrot.slane %v1288, %v1292
        %v1311 = vunpack.c.l.b16 %v1272
        %v1312 = vunpack.c.l.b16 %v1273
        %v1313 = vunpack.c.l.b16 %v1274
        %v1314 = vunpack.c.l.b16 %v1275
        %v1315 = vunpack.c.l.b16 %v1276
        %v1316 = vunpack.c.l.b16 %v1277
        %v1317 = vunpack.c.l.b16 %v1278
        %v1318 = vunpack.c.l.b16 %v1279
        %v1319 = vunpack.c.l.b16 %v1280
        %v1320 = vunpack.c.l.b16 %v1281
        %v1321 = vunpack.c.l.b16 %v1282
        %v1322 = vunpack.c.l.b16 %v1283
        %v1323 = vunpack.c.l.b16 %v1284
        %v1324 = vunpack.c.l.b16 %v1285
        %v1325 = vunpack.c.l.b16 %v1286
        %v1326 = vunpack.c.l.b16 %v1287
        %v1327 = vpack.c.b16 %v1312, %v1311
        %v1328 = vpack.c.b16 %v1314, %v1313
        %v1329 = vpack.c.b16 %v1316, %v1315
        %v1330 = vpack.c.b16 %v1318, %v1317
        %v1331 = vpack.c.b16 %v1320, %v1319
        %v1332 = vpack.c.b16 %v1322, %v1321
        %v1333 = vpack.c.b16 %v1324, %v1323
        %v1334 = vpack.c.b16 %v1326, %v1325
        %1343 = vmatprep.subr.bf16.mxu0 0
        %1344 = vmatpush1.bf16.msra.mxu0 %v1327
        %1345 = vmatprep.subr.bf16.mxu0 0
        %1346 = vmatpush1.bf16.msra.mxu0 %v1328
        %1347 = vmatprep.subr.bf16.mxu0 0
        %1348 = vmatpush1.bf16.msra.mxu0 %v1329
        %1349 = vmatprep.subr.bf16.mxu0 0
        %1350 = vmatpush1.bf16.msra.mxu0 %v1330
        %1351 = vmatprep.subr.bf16.mxu0 0
        %1352 = vmatpush1.bf16.msra.mxu0 %v1331
        %1353 = vmatprep.subr.bf16.mxu0 0
        %1354 = vmatpush1.bf16.msra.mxu0 %v1332
        %1355 = vmatprep.subr.bf16.mxu0 0
        %1356 = vmatpush1.bf16.msra.mxu0 %v1333
        %1357 = vmatprep.subr.bf16.mxu0 0
        %1358 = vmatpush1.bf16.msra.mxu0 %v1334
        %1359 = vmatprep.subr.bf16.mxu0 0
        %1360 = vmatpush1.bf16.msra.mxu0 0
        %1361 = vmatprep.subr.bf16.mxu0 0
        %1362 = vmatpush1.bf16.msra.mxu0 0
        %1363 = vmatprep.subr.bf16.mxu0 0
        %1364 = vmatpush1.bf16.msra.mxu0 0
        %1365 = vmatprep.subr.bf16.mxu0 0
        %1366 = vmatpush1.bf16.msra.mxu0 0
        %1367 = vmatprep.subr.bf16.mxu0 0
        %1368 = vmatpush1.bf16.msra.mxu0 0
        %1369 = vmatprep.subr.bf16.mxu0 0
        %1370 = vmatpush1.bf16.msra.mxu0 0
        %1371 = vmatprep.subr.bf16.mxu0 0
        %1372 = vmatpush1.bf16.msra.mxu0 0
        %1373 = vmatprep.subr.bf16.mxu0 0
        %1374 = vmatpush1.bf16.msra.mxu0 0
        %1375 = vmatprep.mubr.bf16.mxu0 0
        %1376 = vmatmul.mubr.bf16.gmra.mrb[0].mxu0 %v1264
        %v1377 = vpop.f32.mrb[0].mxu0
        %v1378 = vadd.f32 %v1293, %v1377
        %v1379 = vpop.f32.mrb[0].mxu0
        %v1380 = vpop.f32.mrb[0].mxu0
        %v1381 = vadd.f32 %v1293, %v1380
        %v1382 = vpop.f32.mrb[0].mxu0
        %1383 = vmatprep.mubr.bf16.mxu0 0
        %1384 = vmatmul.mubr.bf16.gmra.mrb[0].mxu0 %v1265
        %v1385 = vpop.f32.mrb[0].mxu0
        %v1386 = vadd.f32 %v1293, %v1385
        %v1387 = vpop.f32.mrb[0].mxu0
        %v1388 = vpop.f32.mrb[0].mxu0
        %v1389 = vadd.f32 %v1293, %v1388
        %v1390 = vpop.f32.mrb[0].mxu0
        %1391 = vmatprep.mubr.bf16.mxu0 0
        %1392 = vmatmul.mubr.bf16.gmra.mrb[0].mxu0 %v1266
        %v1393 = vpop.f32.mrb[0].mxu0
        %v1394 = vadd.f32 %v1293, %v1393
        %v1395 = vpop.f32.mrb[0].mxu0
        %v1396 = vpop.f32.mrb[0].mxu0
        %v1397 = vadd.f32 %v1293, %v1396
        %v1398 = vpop.f32.mrb[0].mxu0
        %1399 = vmatprep.mubr.bf16.mxu0 0
        %1400 = vmatmul.mubr.bf16.gmra.mrb[0].mxu0 %v1267
        %v1401 = vpop.f32.mrb[0].mxu0
        %v1402 = vadd.f32 %v1293, %v1401
        %v1403 = vpop.f32.mrb[0].mxu0
        %v1404 = vpop.f32.mrb[0].mxu0
        %v1405 = vadd.f32 %v1293, %v1404
        %v1406 = vpop.f32.mrb[0].mxu0
        %1407 = vmatprep.mubr.bf16.mxu0 0
        %1408 = vmatmul.mubr.bf16.gmra.mrb[0].mxu0 %v1268
        %v1409 = vpop.f32.mrb[0].mxu0
        %v1410 = vadd.f32 %v1293, %v1409
        %v1411 = vpop.f32.mrb[0].mxu0
        %v1412 = vpop.f32.mrb[0].mxu0
        %v1413 = vadd.f32 %v1293, %v1412
        %v1414 = vpop.f32.mrb[0].mxu0
        %1415 = vmatprep.mubr.bf16.mxu0 0
        %1416 = vmatmul.mubr.bf16.gmra.mrb[0].mxu0 %v1269
        %v1417 = vpop.f32.mrb[0].mxu0
        %v1418 = vadd.f32 %v1293, %v1417
        %v1419 = vpop.f32.mrb[0].mxu0
        %v1420 = vpop.f32.mrb[0].mxu0
        %v1421 = vadd.f32 %v1293, %v1420
        %v1422 = vpop.f32.mrb[0].mxu0
        %1423 = vmatprep.mubr.bf16.mxu0 0
        %1424 = vmatmul.mubr.bf16.gmra.mrb[0].mxu0 %v1270
        %v1425 = vpop.f32.mrb[0].mxu0
        %v1426 = vadd.f32 %v1293, %v1425
        %v1427 = vpop.f32.mrb[0].mxu0
        %v1428 = vpop.f32.mrb[0].mxu0
        %v1429 = vadd.f32 %v1293, %v1428
        %v1430 = vpop.f32.mrb[0].mxu0
        %1431 = vmatprep.mubr.bf16.mxu0 0
        %1432 = vmatmul.mubr.bf16.gmra.mrb[0].mxu0 %v1271
        %v1433 = vpop.f32.mrb[0].mxu0
        %v1434 = vadd.f32 %v1293, %v1433
        %v1435 = vpop.f32.mrb[0].mxu0
        %v1436 = vpop.f32.mrb[0].mxu0
        %v1437 = vadd.f32 %v1293, %v1436
        %v1438 = vpop.f32.mrb[0].mxu0
        %1439 = vdwg.mxu0
        %vm1440 = vcmp.gt.f32.partialorder %v1378, 0.0
        %vm1441 = vcmp.gt.f32.partialorder %v1381, 0.0
        %vm1442 = vcmp.gt.f32.partialorder %v1386, 0.0
        %vm1443 = vcmp.gt.f32.partialorder %v1389, 0.0
        %vm1444 = vcmp.gt.f32.partialorder %v1394, 0.0
        %vm1445 = vcmp.gt.f32.partialorder %v1397, 0.0
        %vm1446 = vcmp.gt.f32.partialorder %v1402, 0.0
        %vm1447 = vcmp.gt.f32.partialorder %v1405, 0.0
        %vm1448 = vcmp.gt.f32.partialorder %v1410, 0.0
        %vm1449 = vcmp.gt.f32.partialorder %v1413, 0.0
        %vm1450 = vcmp.gt.f32.partialorder %v1418, 0.0
        %vm1451 = vcmp.gt.f32.partialorder %v1421, 0.0
        %vm1452 = vcmp.gt.f32.partialorder %v1426, 0.0
        %vm1453 = vcmp.gt.f32.partialorder %v1429, 0.0
        %vm1454 = vcmp.gt.f32.partialorder %v1434, 0.0
        %vm1455 = vcmp.gt.f32.partialorder %v1437, 0.0
        %v1456 = vmul.f32 %v1378, 0.01
        %v1457 = vmul.f32 %v1381, 0.01
        %v1458 = vmul.f32 %v1386, 0.01
        %v1459 = vmul.f32 %v1389, 0.01
        %v1460 = vmul.f32 %v1394, 0.01
        %v1461 = vmul.f32 %v1397, 0.01
        %v1462 = vmul.f32 %v1402, 0.01
        %v1463 = vmul.f32 %v1405, 0.01
        %v1464 = vmul.f32 %v1410, 0.01
        %v1465 = vmul.f32 %v1413, 0.01
        %v1466 = vmul.f32 %v1418, 0.01
        %v1467 = vmul.f32 %v1421, 0.01
        %v1468 = vmul.f32 %v1426, 0.01
        %v1469 = vmul.f32 %v1429, 0.01
        %v1470 = vmul.f32 %v1434, 0.01
        %v1471 = vmul.f32 %v1437, 0.01
        %v1472 = vsel %vm1440, %v1378, %v1456
        %v1473 = vsel %vm1441, %v1381, %v1457
        %v1474 = vsel %vm1442, %v1386, %v1458
        %v1475 = vsel %vm1443, %v1389, %v1459
        %v1476 = vsel %vm1444, %v1394, %v1460
        %v1477 = vsel %vm1445, %v1397, %v1461
        %v1478 = vsel %vm1446, %v1402, %v1462
        %v1479 = vsel %vm1447, %v1405, %v1463
        %v1480 = vsel %vm1448, %v1410, %v1464
        %v1481 = vsel %vm1449, %v1413, %v1465
        %v1482 = vsel %vm1450, %v1418, %v1466
        %v1483 = vsel %vm1451, %v1421, %v1467
        %v1484 = vsel %vm1452, %v1426, %v1468
        %v1485 = vsel %vm1453, %v1429, %v1469
        %v1486 = vsel %vm1454, %v1434, %v1470
        %v1487 = vsel %vm1455, %v1437, %v1471
        %v1488 = vpack.c.bf16 %v1249, %v1248
        %v1489 = vpack.c.bf16 %v1251, %v1250
        %v1490 = vpack.c.bf16 %v1253, %v1252
        %v1491 = vpack.c.bf16 %v1255, %v1254
        %v1492 = vpack.c.bf16 %v1257, %v1256
        %v1493 = vpack.c.bf16 %v1259, %v1258
        %v1494 = vpack.c.bf16 %v1261, %v1260
        %v1495 = vpack.c.bf16 %v1263, %v1262
        %1496 = vmatprep.subr.bf16.mxu0 0
        %1497 = vmatpush1.bf16.msra.mxu0 %v1327
        %1498 = vmatprep.subr.bf16.mxu0 0
        %1499 = vmatpush1.bf16.msra.mxu0 %v1328
        %1500 = vmatprep.subr.bf16.mxu0 0
        %1501 = vmatpush1.bf16.msra.mxu0 %v1329
        %1502 = vmatprep.subr.bf16.mxu0 0
        %1503 = vmatpush1.bf16.msra.mxu0 %v1330
        %1504 = vmatprep.subr.bf16.mxu0 0
        %1505 = vmatpush1.bf16.msra.mxu0 %v1331
        %1506 = vmatprep.subr.bf16.mxu0 0
        %1507 = vmatpush1.bf16.msra.mxu0 %v1332
        %1508 = vmatprep.subr.bf16.mxu0 0
        %1509 = vmatpush1.bf16.msra.mxu0 %v1333
        %1510 = vmatprep.subr.bf16.mxu0 0
        %1511 = vmatpush1.bf16.msra.mxu0 %v1334
        %1512 = vmatprep.subr.bf16.mxu0 0
        %1513 = vmatpush1.bf16.msra.mxu0 0
        %1514 = vmatprep.subr.bf16.mxu0 0
        %1515 = vmatpush1.bf16.msra.mxu0 0
        %1516 = vmatprep.subr.bf16.mxu0 0
        %1517 = vmatpush1.bf16.msra.mxu0 0
        %1518 = vmatprep.subr.bf16.mxu0 0
        %1519 = vmatpush1.bf16.msra.mxu0 0
        %1520 = vmatprep.subr.bf16.mxu0 0
        %1521 = vmatpush1.bf16.msra.mxu0 0
        %1522 = vmatprep.subr.bf16.mxu0 0
        %1523 = vmatpush1.bf16.msra.mxu0 0
        %1524 = vmatprep.subr.bf16.mxu0 0
        %1525 = vmatpush1.bf16.msra.mxu0 0
        %1526 = vmatprep.subr.bf16.mxu0 0
        %1527 = vmatpush1.bf16.msra.mxu0 0
        %1528 = vmatprep.mubr.bf16.mxu0 0
        %1529 = vmatmul.mubr.bf16.gmra.mrb[0].mxu0 %v1488
        %v1530 = vpop.f32.mrb[0].mxu0
        %v1531 = vadd.f32 %v1293, %v1530
        %v1532 = vpop.f32.mrb[0].mxu0
        %v1533 = vpop.f32.mrb[0].mxu0
        %v1534 = vadd.f32 %v1293, %v1533
        %v1535 = vpop.f32.mrb[0].mxu0
        %1536 = vmatprep.mubr.bf16.mxu0 0
        %1537 = vmatmul.mubr.bf16.gmra.mrb[0].mxu0 %v1489
        %v1538 = vpop.f32.mrb[0].mxu0
        %v1539 = vadd.f32 %v1293, %v1538
        %v1540 = vpop.f32.mrb[0].mxu0
        %v1541 = vpop.f32.mrb[0].mxu0
        %v1542 = vadd.f32 %v1293, %v1541
        %v1543 = vpop.f32.mrb[0].mxu0
        %1544 = vmatprep.mubr.bf16.mxu0 0
        %1545 = vmatmul.mubr.bf16.gmra.mrb[0].mxu0 %v1490
        %v1546 = vpop.f32.mrb[0].mxu0
        %v1547 = vadd.f32 %v1293, %v1546
        %v1548 = vpop.f32.mrb[0].mxu0
        %v1549 = vpop.f32.mrb[0].mxu0
        %v1550 = vadd.f32 %v1293, %v1549
        %v1551 = vpop.f32.mrb[0].mxu0
        %1552 = vmatprep.mubr.bf16.mxu0 0
        %1553 = vmatmul.mubr.bf16.gmra.mrb[0].mxu0 %v1491
        %v1554 = vpop.f32.mrb[0].mxu0
        %v1555 = vadd.f32 %v1293, %v1554
        %v1556 = vpop.f32.mrb[0].mxu0
        %v1557 = vpop.f32.mrb[0].mxu0
        %v1558 = vadd.f32 %v1293, %v1557
        %v1559 = vpop.f32.mrb[0].mxu0
        %1560 = vmatprep.mubr.bf16.mxu0 0
        %1561 = vmatmul.mubr.bf16.gmra.mrb[0].mxu0 %v1492
        %v1562 = vpop.f32.mrb[0].mxu0
        %v1563 = vadd.f32 %v1293, %v1562
        %v1564 = vpop.f32.mrb[0].mxu0
        %v1565 = vpop.f32.mrb[0].mxu0
        %v1566 = vadd.f32 %v1293, %v1565
        %v1567 = vpop.f32.mrb[0].mxu0
        %1568 = vmatprep.mubr.bf16.mxu0 0
        %1569 = vmatmul.mubr.bf16.gmra.mrb[0].mxu0 %v1493
        %v1570 = vpop.f32.mrb[0].mxu0
        %v1571 = vadd.f32 %v1293, %v1570
        %v1572 = vpop.f32.mrb[0].mxu0
        %v1573 = vpop.f32.mrb[0].mxu0
        %v1574 = vadd.f32 %v1293, %v1573
        %v1575 = vpop.f32.mrb[0].mxu0
        %1576 = vmatprep.mubr.bf16.mxu0 0
        %1577 = vmatmul.mubr.bf16.gmra.mrb[0].mxu0 %v1494
        %v1578 = vpop.f32.mrb[0].mxu0
        %v1579 = vadd.f32 %v1293, %v1578
        %v1580 = vpop.f32.mrb[0].mxu0
        %v1581 = vpop.f32.mrb[0].mxu0
        %v1582 = vadd.f32 %v1293, %v1581
        %v1583 = vpop.f32.mrb[0].mxu0
        %1584 = vmatprep.mubr.bf16.mxu0 0
        %1585 = vmatmul.mubr.bf16.gmra.mrb[0].mxu0 %v1495
        %v1586 = vpop.f32.mrb[0].mxu0
        %v1587 = vadd.f32 %v1293, %v1586
        %v1588 = vpop.f32.mrb[0].mxu0
        %v1589 = vpop.f32.mrb[0].mxu0
        %v1590 = vadd.f32 %v1293, %v1589
        %v1591 = vpop.f32.mrb[0].mxu0
        %1592 = vdwg.mxu0
        %vm1593 = vcmp.gt.f32.partialorder %v1531, 0.0
        %vm1594 = vcmp.gt.f32.partialorder %v1534, 0.0
        %vm1595 = vcmp.gt.f32.partialorder %v1539, 0.0
        %vm1596 = vcmp.gt.f32.partialorder %v1542, 0.0
        %vm1597 = vcmp.gt.f32.partialorder %v1547, 0.0
        %vm1598 = vcmp.gt.f32.partialorder %v1550, 0.0
        %vm1599 = vcmp.gt.f32.partialorder %v1555, 0.0
        %vm1600 = vcmp.gt.f32.partialorder %v1558, 0.0
        %vm1601 = vcmp.gt.f32.partialorder %v1563, 0.0
        %vm1602 = vcmp.gt.f32.partialorder %v1566, 0.0
        %vm1603 = vcmp.gt.f32.partialorder %v1571, 0.0
        %vm1604 = vcmp.gt.f32.partialorder %v1574, 0.0
        %vm1605 = vcmp.gt.f32.partialorder %v1579, 0.0
        %vm1606 = vcmp.gt.f32.partialorder %v1582, 0.0
        %vm1607 = vcmp.gt.f32.partialorder %v1587, 0.0
        %vm1608 = vcmp.gt.f32.partialorder %v1590, 0.0
        %v1609 = vmul.f32 %v1531, 0.01
        %v1610 = vmul.f32 %v1534, 0.01
        %v1611 = vmul.f32 %v1539, 0.01
        %v1612 = vmul.f32 %v1542, 0.01
        %v1613 = vmul.f32 %v1547, 0.01
        %v1614 = vmul.f32 %v1550, 0.01
        %v1615 = vmul.f32 %v1555, 0.01
        %v1616 = vmul.f32 %v1558, 0.01
        %v1617 = vmul.f32 %v1563, 0.01
        %v1618 = vmul.f32 %v1566, 0.01
        %v1619 = vmul.f32 %v1571, 0.01
        %v1620 = vmul.f32 %v1574, 0.01
        %v1621 = vmul.f32 %v1579, 0.01
        %v1622 = vmul.f32 %v1582, 0.01
        %v1623 = vmul.f32 %v1587, 0.01
        %v1624 = vmul.f32 %v1590, 0.01
        %v1625 = vsel %vm1593, %v1531, %v1609
        %v1626 = vsel %vm1594, %v1534, %v1610
        %v1627 = vsel %vm1595, %v1539, %v1611
        %v1628 = vsel %vm1596, %v1542, %v1612
        %v1629 = vsel %vm1597, %v1547, %v1613
        %v1630 = vsel %vm1598, %v1550, %v1614
        %v1631 = vsel %vm1599, %v1555, %v1615
        %v1632 = vsel %vm1600, %v1558, %v1616
        %v1633 = vsel %vm1601, %v1563, %v1617
        %v1634 = vsel %vm1602, %v1566, %v1618
        %v1635 = vsel %vm1603, %v1571, %v1619
        %v1636 = vsel %vm1604, %v1574, %v1620
        %v1637 = vsel %vm1605, %v1579, %v1621
        %v1638 = vsel %vm1606, %v1582, %v1622
        %v1639 = vsel %vm1607, %v1587, %v1623
        %v1640 = vsel %vm1608, %v1590, %v1624
        %v1641 = vpack.c.bf16 %v1473, %v1472
        %v1642 = vpack.c.bf16 %v1475, %v1474
        %v1643 = vpack.c.bf16 %v1477, %v1476
        %v1644 = vpack.c.bf16 %v1479, %v1478
        %v1645 = vpack.c.bf16 %v1481, %v1480
        %v1646 = vpack.c.bf16 %v1483, %v1482
        %v1647 = vpack.c.bf16 %v1485, %v1484
        %v1648 = vpack.c.bf16 %v1487, %v1486
        %v1649 = vld [vmem:[#allocation10] sm:$0xf]
        %v1650 = vld [vmem:[#allocation10 + $0x4] sm:$0xf]
        %v1651 = vld [vmem:[#allocation10 + $0x8] sm:$0xf]
        %v1652 = vld [vmem:[#allocation10 + $0xc] sm:$0xf]
        %v1653 = vld [vmem:[#allocation10 + $0x10] sm:$0xf]
        %v1654 = vld [vmem:[#allocation10 + $0x14] sm:$0xf]
        %v1655 = vld [vmem:[#allocation10 + $0x18] sm:$0xf]
        %v1656 = vld [vmem:[#allocation10 + $0x1c] sm:$0xf]
        %v1657 = vld [vmem:[#allocation10 + $0x20] sm:$0xf]
        %v1658 = vld [vmem:[#allocation10 + $0x24] sm:$0xf]
        %v1659 = vld [vmem:[#allocation10 + $0x28] sm:$0xf]
        %v1660 = vld [vmem:[#allocation10 + $0x2c] sm:$0xf]
        %v1661 = vld [vmem:[#allocation10 + $0x30] sm:$0xf]
        %v1662 = vld [vmem:[#allocation10 + $0x34] sm:$0xf]
        %v1663 = vld [vmem:[#allocation10 + $0x38] sm:$0xf]
        %v1664 = vld [vmem:[#allocation10 + $0x3c] sm:$0xf]
        %v1665 = vld [vmem:[%s8] sm:$0x1]
        %v1667 = vlaneseq
        %v1668 = vshrl.u32 %v1667, 7
        %v1669 = vsub.s32 0, %v1668
        %v1670 = vrot.slane %v1665, %v1669
        %v1688 = vunpack.c.l.b16 %v1649
        %v1689 = vunpack.c.l.b16 %v1650
        %v1690 = vunpack.c.l.b16 %v1651
        %v1691 = vunpack.c.l.b16 %v1652
        %v1692 = vunpack.c.l.b16 %v1653
        %v1693 = vunpack.c.l.b16 %v1654
        %v1694 = vunpack.c.l.b16 %v1655
        %v1695 = vunpack.c.l.b16 %v1656
        %v1696 = vunpack.c.l.b16 %v1657
        %v1697 = vunpack.c.l.b16 %v1658
        %v1698 = vunpack.c.l.b16 %v1659
        %v1699 = vunpack.c.l.b16 %v1660
        %v1700 = vunpack.c.l.b16 %v1661
        %v1701 = vunpack.c.l.b16 %v1662
        %v1702 = vunpack.c.l.b16 %v1663
        %v1703 = vunpack.c.l.b16 %v1664
        %v1704 = vpack.c.b16 %v1689, %v1688
        %v1705 = vpack.c.b16 %v1691, %v1690
        %v1706 = vpack.c.b16 %v1693, %v1692
        %v1707 = vpack.c.b16 %v1695, %v1694
        %v1708 = vpack.c.b16 %v1697, %v1696
        %v1709 = vpack.c.b16 %v1699, %v1698
        %v1710 = vpack.c.b16 %v1701, %v1700
        %v1711 = vpack.c.b16 %v1703, %v1702
        %1720 = vmatprep.subr.bf16.mxu0 0
        %1721 = vmatpush1.bf16.msra.mxu0 %v1704
        %1722 = vmatprep.subr.bf16.mxu0 0
        %1723 = vmatpush1.bf16.msra.mxu0 %v1705
        %1724 = vmatprep.subr.bf16.mxu0 0
        %1725 = vmatpush1.bf16.msra.mxu0 %v1706
        %1726 = vmatprep.subr.bf16.mxu0 0
        %1727 = vmatpush1.bf16.msra.mxu0 %v1707
        %1728 = vmatprep.subr.bf16.mxu0 0
        %1729 = vmatpush1.bf16.msra.mxu0 %v1708
        %1730 = vmatprep.subr.bf16.mxu0 0
        %1731 = vmatpush1.bf16.msra.mxu0 %v1709
        %1732 = vmatprep.subr.bf16.mxu0 0
        %1733 = vmatpush1.bf16.msra.mxu0 %v1710
        %1734 = vmatprep.subr.bf16.mxu0 0
        %1735 = vmatpush1.bf16.msra.mxu0 %v1711
        %1736 = vmatprep.subr.bf16.mxu0 0
        %1737 = vmatpush1.bf16.msra.mxu0 0
        %1738 = vmatprep.subr.bf16.mxu0 0
        %1739 = vmatpush1.bf16.msra.mxu0 0
        %1740 = vmatprep.subr.bf16.mxu0 0
        %1741 = vmatpush1.bf16.msra.mxu0 0
        %1742 = vmatprep.subr.bf16.mxu0 0
        %1743 = vmatpush1.bf16.msra.mxu0 0
        %1744 = vmatprep.subr.bf16.mxu0 0
        %1745 = vmatpush1.bf16.msra.mxu0 0
        %1746 = vmatprep.subr.bf16.mxu0 0
        %1747 = vmatpush1.bf16.msra.mxu0 0
        %1748 = vmatprep.subr.bf16.mxu0 0
        %1749 = vmatpush1.bf16.msra.mxu0 0
        %1750 = vmatprep.subr.bf16.mxu0 0
        %1751 = vmatpush1.bf16.msra.mxu0 0
        %1752 = vmatprep.mubr.bf16.mxu0 0
        %1753 = vmatmul.mubr.bf16.gmra.mrb[0].mxu0 %v1641
        %v1754 = vpop.f32.mrb[0].mxu0
        %v1755 = vadd.f32 %v1670, %v1754
        %v1756 = vpop.f32.mrb[0].mxu0
        %v1757 = vpop.f32.mrb[0].mxu0
        %v1758 = vadd.f32 %v1670, %v1757
        %v1759 = vpop.f32.mrb[0].mxu0
        %1760 = vmatprep.mubr.bf16.mxu0 0
        %1761 = vmatmul.mubr.bf16.gmra.mrb[0].mxu0 %v1642
        %v1762 = vpop.f32.mrb[0].mxu0
        %v1763 = vadd.f32 %v1670, %v1762
        %v1764 = vpop.f32.mrb[0].mxu0
        %v1765 = vpop.f32.mrb[0].mxu0
        %v1766 = vadd.f32 %v1670, %v1765
        %v1767 = vpop.f32.mrb[0].mxu0
        %1768 = vmatprep.mubr.bf16.mxu0 0
        %1769 = vmatmul.mubr.bf16.gmra.mrb[0].mxu0 %v1643
        %v1770 = vpop.f32.mrb[0].mxu0
        %v1771 = vadd.f32 %v1670, %v1770
        %v1772 = vpop.f32.mrb[0].mxu0
        %v1773 = vpop.f32.mrb[0].mxu0
        %v1774 = vadd.f32 %v1670, %v1773
        %v1775 = vpop.f32.mrb[0].mxu0
        %1776 = vmatprep.mubr.bf16.mxu0 0
        %1777 = vmatmul.mubr.bf16.gmra.mrb[0].mxu0 %v1644
        %v1778 = vpop.f32.mrb[0].mxu0
        %v1779 = vadd.f32 %v1670, %v1778
        %v1780 = vpop.f32.mrb[0].mxu0
        %v1781 = vpop.f32.mrb[0].mxu0
        %v1782 = vadd.f32 %v1670, %v1781
        %v1783 = vpop.f32.mrb[0].mxu0
        %1784 = vmatprep.mubr.bf16.mxu0 0
        %1785 = vmatmul.mubr.bf16.gmra.mrb[0].mxu0 %v1645
        %v1786 = vpop.f32.mrb[0].mxu0
        %v1787 = vadd.f32 %v1670, %v1786
        %v1788 = vpop.f32.mrb[0].mxu0
        %v1789 = vpop.f32.mrb[0].mxu0
        %v1790 = vadd.f32 %v1670, %v1789
        %v1791 = vpop.f32.mrb[0].mxu0
        %1792 = vmatprep.mubr.bf16.mxu0 0
        %1793 = vmatmul.mubr.bf16.gmra.mrb[0].mxu0 %v1646
        %v1794 = vpop.f32.mrb[0].mxu0
        %v1795 = vadd.f32 %v1670, %v1794
        %v1796 = vpop.f32.mrb[0].mxu0
        %v1797 = vpop.f32.mrb[0].mxu0
        %v1798 = vadd.f32 %v1670, %v1797
        %v1799 = vpop.f32.mrb[0].mxu0
        %1800 = vmatprep.mubr.bf16.mxu0 0
        %1801 = vmatmul.mubr.bf16.gmra.mrb[0].mxu0 %v1647
        %v1802 = vpop.f32.mrb[0].mxu0
        %v1803 = vadd.f32 %v1670, %v1802
        %v1804 = vpop.f32.mrb[0].mxu0
        %v1805 = vpop.f32.mrb[0].mxu0
        %v1806 = vadd.f32 %v1670, %v1805
        %v1807 = vpop.f32.mrb[0].mxu0
        %1808 = vmatprep.mubr.bf16.mxu0 0
        %1809 = vmatmul.mubr.bf16.gmra.mrb[0].mxu0 %v1648
        %v1810 = vpop.f32.mrb[0].mxu0
        %v1811 = vadd.f32 %v1670, %v1810
        %v1812 = vpop.f32.mrb[0].mxu0
        %v1813 = vpop.f32.mrb[0].mxu0
        %v1814 = vadd.f32 %v1670, %v1813
        %v1815 = vpop.f32.mrb[0].mxu0
        %1816 = vdwg.mxu0
        %vm1817 = vcmp.gt.f32.partialorder %v1755, 0.0
        %vm1818 = vcmp.gt.f32.partialorder %v1758, 0.0
        %vm1819 = vcmp.gt.f32.partialorder %v1763, 0.0
        %vm1820 = vcmp.gt.f32.partialorder %v1766, 0.0
        %vm1821 = vcmp.gt.f32.partialorder %v1771, 0.0
        %vm1822 = vcmp.gt.f32.partialorder %v1774, 0.0
        %vm1823 = vcmp.gt.f32.partialorder %v1779, 0.0
        %vm1824 = vcmp.gt.f32.partialorder %v1782, 0.0
        %vm1825 = vcmp.gt.f32.partialorder %v1787, 0.0
        %vm1826 = vcmp.gt.f32.partialorder %v1790, 0.0
        %vm1827 = vcmp.gt.f32.partialorder %v1795, 0.0
        %vm1828 = vcmp.gt.f32.partialorder %v1798, 0.0
        %vm1829 = vcmp.gt.f32.partialorder %v1803, 0.0
        %vm1830 = vcmp.gt.f32.partialorder %v1806, 0.0
        %vm1831 = vcmp.gt.f32.partialorder %v1811, 0.0
        %vm1832 = vcmp.gt.f32.partialorder %v1814, 0.0
        %v1833 = vmul.f32 %v1755, 0.01
        %v1834 = vmul.f32 %v1758, 0.01
        %v1835 = vmul.f32 %v1763, 0.01
        %v1836 = vmul.f32 %v1766, 0.01
        %v1837 = vmul.f32 %v1771, 0.01
        %v1838 = vmul.f32 %v1774, 0.01
        %v1839 = vmul.f32 %v1779, 0.01
        %v1840 = vmul.f32 %v1782, 0.01
        %v1841 = vmul.f32 %v1787, 0.01
        %v1842 = vmul.f32 %v1790, 0.01
        %v1843 = vmul.f32 %v1795, 0.01
        %v1844 = vmul.f32 %v1798, 0.01
        %v1845 = vmul.f32 %v1803, 0.01
        %v1846 = vmul.f32 %v1806, 0.01
        %v1847 = vmul.f32 %v1811, 0.01
        %v1848 = vmul.f32 %v1814, 0.01
        %v1849 = vsel %vm1817, %v1755, %v1833
        %v1850 = vsel %vm1818, %v1758, %v1834
        %v1851 = vsel %vm1819, %v1763, %v1835
        %v1852 = vsel %vm1820, %v1766, %v1836
        %v1853 = vsel %vm1821, %v1771, %v1837
        %v1854 = vsel %vm1822, %v1774, %v1838
        %v1855 = vsel %vm1823, %v1779, %v1839
        %v1856 = vsel %vm1824, %v1782, %v1840
        %v1857 = vsel %vm1825, %v1787, %v1841
        %v1858 = vsel %vm1826, %v1790, %v1842
        %v1859 = vsel %vm1827, %v1795, %v1843
        %v1860 = vsel %vm1828, %v1798, %v1844
        %v1861 = vsel %vm1829, %v1803, %v1845
        %v1862 = vsel %vm1830, %v1806, %v1846
        %v1863 = vsel %vm1831, %v1811, %v1847
        %v1864 = vsel %vm1832, %v1814, %v1848
        %v1865 = vpack.c.bf16 %v1626, %v1625
        %v1866 = vpack.c.bf16 %v1628, %v1627
        %v1867 = vpack.c.bf16 %v1630, %v1629
        %v1868 = vpack.c.bf16 %v1632, %v1631
        %v1869 = vpack.c.bf16 %v1634, %v1633
        %v1870 = vpack.c.bf16 %v1636, %v1635
        %v1871 = vpack.c.bf16 %v1638, %v1637
        %v1872 = vpack.c.bf16 %v1640, %v1639
        %1873 = vmatprep.subr.bf16.mxu0 0
        %1874 = vmatpush1.bf16.msra.mxu0 %v1704
        %1875 = vmatprep.subr.bf16.mxu0 0
        %1876 = vmatpush1.bf16.msra.mxu0 %v1705
        %1877 = vmatprep.subr.bf16.mxu0 0
        %1878 = vmatpush1.bf16.msra.mxu0 %v1706
        %1879 = vmatprep.subr.bf16.mxu0 0
        %1880 = vmatpush1.bf16.msra.mxu0 %v1707
        %1881 = vmatprep.subr.bf16.mxu0 0
        %1882 = vmatpush1.bf16.msra.mxu0 %v1708
        %1883 = vmatprep.subr.bf16.mxu0 0
        %1884 = vmatpush1.bf16.msra.mxu0 %v1709
        %1885 = vmatprep.subr.bf16.mxu0 0
        %1886 = vmatpush1.bf16.msra.mxu0 %v1710
        %1887 = vmatprep.subr.bf16.mxu0 0
        %1888 = vmatpush1.bf16.msra.mxu0 %v1711
        %1889 = vmatprep.subr.bf16.mxu0 0
        %1890 = vmatpush1.bf16.msra.mxu0 0
        %1891 = vmatprep.subr.bf16.mxu0 0
        %1892 = vmatpush1.bf16.msra.mxu0 0
        %1893 = vmatprep.subr.bf16.mxu0 0
        %1894 = vmatpush1.bf16.msra.mxu0 0
        %1895 = vmatprep.subr.bf16.mxu0 0
        %1896 = vmatpush1.bf16.msra.mxu0 0
        %1897 = vmatprep.subr.bf16.mxu0 0
        %1898 = vmatpush1.bf16.msra.mxu0 0
        %1899 = vmatprep.subr.bf16.mxu0 0
        %1900 = vmatpush1.bf16.msra.mxu0 0
        %1901 = vmatprep.subr.bf16.mxu0 0
        %1902 = vmatpush1.bf16.msra.mxu0 0
        %1903 = vmatprep.subr.bf16.mxu0 0
        %1904 = vmatpush1.bf16.msra.mxu0 0
        %1905 = vmatprep.mubr.bf16.mxu0 0
        %1906 = vmatmul.mubr.bf16.gmra.mrb[0].mxu0 %v1865
        %v1907 = vpop.f32.mrb[0].mxu0
        %v1908 = vadd.f32 %v1670, %v1907
        %v1909 = vpop.f32.mrb[0].mxu0
        %v1910 = vpop.f32.mrb[0].mxu0
        %v1911 = vadd.f32 %v1670, %v1910
        %v1912 = vpop.f32.mrb[0].mxu0
        %1913 = vmatprep.mubr.bf16.mxu0 0
        %1914 = vmatmul.mubr.bf16.gmra.mrb[0].mxu0 %v1866
        %v1915 = vpop.f32.mrb[0].mxu0
        %v1916 = vadd.f32 %v1670, %v1915
        %v1917 = vpop.f32.mrb[0].mxu0
        %v1918 = vpop.f32.mrb[0].mxu0
        %v1919 = vadd.f32 %v1670, %v1918
        %v1920 = vpop.f32.mrb[0].mxu0
        %1921 = vmatprep.mubr.bf16.mxu0 0
        %1922 = vmatmul.mubr.bf16.gmra.mrb[0].mxu0 %v1867
        %v1923 = vpop.f32.mrb[0].mxu0
        %v1924 = vadd.f32 %v1670, %v1923
        %v1925 = vpop.f32.mrb[0].mxu0
        %v1926 = vpop.f32.mrb[0].mxu0
        %v1927 = vadd.f32 %v1670, %v1926
        %v1928 = vpop.f32.mrb[0].mxu0
        %1929 = vmatprep.mubr.bf16.mxu0 0
        %1930 = vmatmul.mubr.bf16.gmra.mrb[0].mxu0 %v1868
        %v1931 = vpop.f32.mrb[0].mxu0
        %v1932 = vadd.f32 %v1670, %v1931
        %v1933 = vpop.f32.mrb[0].mxu0
        %v1934 = vpop.f32.mrb[0].mxu0
        %v1935 = vadd.f32 %v1670, %v1934
        %v1936 = vpop.f32.mrb[0].mxu0
        %1937 = vmatprep.mubr.bf16.mxu0 0
        %1938 = vmatmul.mubr.bf16.gmra.mrb[0].mxu0 %v1869
        %v1939 = vpop.f32.mrb[0].mxu0
        %v1940 = vadd.f32 %v1670, %v1939
        %v1941 = vpop.f32.mrb[0].mxu0
        %v1942 = vpop.f32.mrb[0].mxu0
        %v1943 = vadd.f32 %v1670, %v1942
        %v1944 = vpop.f32.mrb[0].mxu0
        %1945 = vmatprep.mubr.bf16.mxu0 0
        %1946 = vmatmul.mubr.bf16.gmra.mrb[0].mxu0 %v1870
        %v1947 = vpop.f32.mrb[0].mxu0
        %v1948 = vadd.f32 %v1670, %v1947
        %v1949 = vpop.f32.mrb[0].mxu0
        %v1950 = vpop.f32.mrb[0].mxu0
        %v1951 = vadd.f32 %v1670, %v1950
        %v1952 = vpop.f32.mrb[0].mxu0
        %1953 = vmatprep.mubr.bf16.mxu0 0
        %1954 = vmatmul.mubr.bf16.gmra.mrb[0].mxu0 %v1871
        %v1955 = vpop.f32.mrb[0].mxu0
        %v1956 = vadd.f32 %v1670, %v1955
        %v1957 = vpop.f32.mrb[0].mxu0
        %v1958 = vpop.f32.mrb[0].mxu0
        %v1959 = vadd.f32 %v1670, %v1958
        %v1960 = vpop.f32.mrb[0].mxu0
        %1961 = vmatprep.mubr.bf16.mxu0 0
        %1962 = vmatmul.mubr.bf16.gmra.mrb[0].mxu0 %v1872
        %v1963 = vpop.f32.mrb[0].mxu0
        %v1964 = vadd.f32 %v1670, %v1963
        %v1965 = vpop.f32.mrb[0].mxu0
        %v1966 = vpop.f32.mrb[0].mxu0
        %v1967 = vadd.f32 %v1670, %v1966
        %v1968 = vpop.f32.mrb[0].mxu0
        %1969 = vdwg.mxu0
        %vm1970 = vcmp.gt.f32.partialorder %v1908, 0.0
        %vm1971 = vcmp.gt.f32.partialorder %v1911, 0.0
        %vm1972 = vcmp.gt.f32.partialorder %v1916, 0.0
        %vm1973 = vcmp.gt.f32.partialorder %v1919, 0.0
        %vm1974 = vcmp.gt.f32.partialorder %v1924, 0.0
        %vm1975 = vcmp.gt.f32.partialorder %v1927, 0.0
        %vm1976 = vcmp.gt.f32.partialorder %v1932, 0.0
        %vm1977 = vcmp.gt.f32.partialorder %v1935, 0.0
        %vm1978 = vcmp.gt.f32.partialorder %v1940, 0.0
        %vm1979 = vcmp.gt.f32.partialorder %v1943, 0.0
        %vm1980 = vcmp.gt.f32.partialorder %v1948, 0.0
        %vm1981 = vcmp.gt.f32.partialorder %v1951, 0.0
        %vm1982 = vcmp.gt.f32.partialorder %v1956, 0.0
        %vm1983 = vcmp.gt.f32.partialorder %v1959, 0.0
        %vm1984 = vcmp.gt.f32.partialorder %v1964, 0.0
        %vm1985 = vcmp.gt.f32.partialorder %v1967, 0.0
        %v1986 = vmul.f32 %v1908, 0.01
        %v1987 = vmul.f32 %v1911, 0.01
        %v1988 = vmul.f32 %v1916, 0.01
        %v1989 = vmul.f32 %v1919, 0.01
        %v1990 = vmul.f32 %v1924, 0.01
        %v1991 = vmul.f32 %v1927, 0.01
        %v1992 = vmul.f32 %v1932, 0.01
        %v1993 = vmul.f32 %v1935, 0.01
        %v1994 = vmul.f32 %v1940, 0.01
        %v1995 = vmul.f32 %v1943, 0.01
        %v1996 = vmul.f32 %v1948, 0.01
        %v1997 = vmul.f32 %v1951, 0.01
        %v1998 = vmul.f32 %v1956, 0.01
        %v1999 = vmul.f32 %v1959, 0.01
        %v2000 = vmul.f32 %v1964, 0.01
        %v2001 = vmul.f32 %v1967, 0.01
        %v2002 = vsel %vm1970, %v1908, %v1986
        %v2003 = vsel %vm1971, %v1911, %v1987
        %v2004 = vsel %vm1972, %v1916, %v1988
        %v2005 = vsel %vm1973, %v1919, %v1989
        %v2006 = vsel %vm1974, %v1924, %v1990
        %v2007 = vsel %vm1975, %v1927, %v1991
        %v2008 = vsel %vm1976, %v1932, %v1992
        %v2009 = vsel %vm1977, %v1935, %v1993
        %v2010 = vsel %vm1978, %v1940, %v1994
        %v2011 = vsel %vm1979, %v1943, %v1995
        %v2012 = vsel %vm1980, %v1948, %v1996
        %v2013 = vsel %vm1981, %v1951, %v1997
        %v2014 = vsel %vm1982, %v1956, %v1998
        %v2015 = vsel %vm1983, %v1959, %v1999
        %v2016 = vsel %vm1984, %v1964, %v2000
        %v2017 = vsel %vm1985, %v1967, %v2001
        %v2018 = vld [vmem:[%s9] sm:$0x1]
        %v2020 = vlaneseq
        %v2021 = vshrl.u32 %v2020, 7
        %v2022 = vsub.s32 0, %v2021
        %v2023 = vrot.slane %v2018, %v2022
        %v2025 = vmul.f32 %v1849, %v2023
        %v2026 = vmul.f32 %v1850, %v2023
        %v2027 = vmul.f32 %v1851, %v2023
        %v2028 = vmul.f32 %v1852, %v2023
        %v2029 = vmul.f32 %v1853, %v2023
        %v2030 = vmul.f32 %v1854, %v2023
        %v2031 = vmul.f32 %v1855, %v2023
        %v2032 = vmul.f32 %v1856, %v2023
        %v2033 = vmul.f32 %v1857, %v2023
        %v2034 = vmul.f32 %v1858, %v2023
        %v2035 = vmul.f32 %v1859, %v2023
        %v2036 = vmul.f32 %v1860, %v2023
        %v2037 = vmul.f32 %v1861, %v2023
        %v2038 = vmul.f32 %v1862, %v2023
        %v2039 = vmul.f32 %v1863, %v2023
        %v2040 = vmul.f32 %v1864, %v2023
        %2041 = vadd.xlane.f32.xlu0 %v2025
        %v2042 = vpop.xlane.xlu0 %2041
        %2043 = vadd.xlane.f32.xlu0 %v2026
        %v2044 = vpop.xlane.xlu0 %2043
        %2045 = vadd.xlane.f32.xlu0 %v2027
        %v2046 = vpop.xlane.xlu0 %2045
        %2047 = vadd.xlane.f32.xlu0 %v2028
        %v2048 = vpop.xlane.xlu0 %2047
        %2049 = vadd.xlane.f32.xlu0 %v2029
        %v2050 = vpop.xlane.xlu0 %2049
        %2051 = vadd.xlane.f32.xlu0 %v2030
        %v2052 = vpop.xlane.xlu0 %2051
        %2053 = vadd.xlane.f32.xlu0 %v2031
        %v2054 = vpop.xlane.xlu0 %2053
        %2055 = vadd.xlane.f32.xlu0 %v2032
        %v2056 = vpop.xlane.xlu0 %2055
        %2057 = vadd.xlane.f32.xlu0 %v2033
        %v2058 = vpop.xlane.xlu0 %2057
        %2059 = vadd.xlane.f32.xlu0 %v2034
        %v2060 = vpop.xlane.xlu0 %2059
        %2061 = vadd.xlane.f32.xlu0 %v2035
        %v2062 = vpop.xlane.xlu0 %2061
        %2063 = vadd.xlane.f32.xlu0 %v2036
        %v2064 = vpop.xlane.xlu0 %2063
        %2065 = vadd.xlane.f32.xlu0 %v2037
        %v2066 = vpop.xlane.xlu0 %2065
        %2067 = vadd.xlane.f32.xlu0 %v2038
        %v2068 = vpop.xlane.xlu0 %2067
        %2069 = vadd.xlane.f32.xlu0 %v2039
        %v2070 = vpop.xlane.xlu0 %2069
        %2071 = vadd.xlane.f32.xlu0 %v2040
        %v2072 = vpop.xlane.xlu0 %2071
        %v2073 = vld [vmem:[#allocation2] sm:$0x1]
        %v2075 = vlaneseq
        %v2076 = vshrl.u32 %v2075, 7
        %v2077 = vsub.s32 0, %v2076
        %v2078 = vrot.slane %v2073, %v2077
        %v2080 = vadd.f32 %v2042, %v2078
        %v2081 = vadd.f32 %v2044, %v2078
        %v2082 = vadd.f32 %v2046, %v2078
        %v2083 = vadd.f32 %v2048, %v2078
        %v2084 = vadd.f32 %v2050, %v2078
        %v2085 = vadd.f32 %v2052, %v2078
        %v2086 = vadd.f32 %v2054, %v2078
        %v2087 = vadd.f32 %v2056, %v2078
        %v2088 = vadd.f32 %v2058, %v2078
        %v2089 = vadd.f32 %v2060, %v2078
        %v2090 = vadd.f32 %v2062, %v2078
        %v2091 = vadd.f32 %v2064, %v2078
        %v2092 = vadd.f32 %v2066, %v2078
        %v2093 = vadd.f32 %v2068, %v2078
        %v2094 = vadd.f32 %v2070, %v2078
        %v2095 = vadd.f32 %v2072, %v2078
        %vm2096 = vcmask 7168
        %2097 = vst.msk [vmem:[%s466] sm:$0xff] %vm2096, %v2080
        %2098 = vst.msk [vmem:[%s466 + $0x8] sm:$0xff] %vm2096, %v2081
        %2099 = vst.msk [vmem:[%s466 + $0x10] sm:$0xff] %vm2096, %v2082
        %2100 = vst.msk [vmem:[%s466 + $0x18] sm:$0xff] %vm2096, %v2083
        %2101 = vst.msk [vmem:[%s466 + $0x20] sm:$0xff] %vm2096, %v2084
        %2102 = vst.msk [vmem:[%s466 + $0x28] sm:$0xff] %vm2096, %v2085
        %2103 = vst.msk [vmem:[%s466 + $0x30] sm:$0xff] %vm2096, %v2086
        %2104 = vst.msk [vmem:[%s466 + $0x38] sm:$0xff] %vm2096, %v2087
        %2105 = vst.msk [vmem:[%s466 + $0x40] sm:$0xff] %vm2096, %v2088
        %2106 = vst.msk [vmem:[%s466 + $0x48] sm:$0xff] %vm2096, %v2089
        %2107 = vst.msk [vmem:[%s466 + $0x50] sm:$0xff] %vm2096, %v2090
        %2108 = vst.msk [vmem:[%s466 + $0x58] sm:$0xff] %vm2096, %v2091
        %2109 = vst.msk [vmem:[%s466 + $0x60] sm:$0xff] %vm2096, %v2092
        %2110 = vst.msk [vmem:[%s466 + $0x68] sm:$0xff] %vm2096, %v2093
        %2111 = vst.msk [vmem:[%s466 + $0x70] sm:$0xff] %vm2096, %v2094
        %2112 = vst.msk [vmem:[%s466 + $0x78] sm:$0xff] %vm2096, %v2095
        %v2113 = vld [vmem:[%s9] sm:$0x1]
        %v2115 = vlaneseq
        %v2116 = vshrl.u32 %v2115, 7
        %v2117 = vsub.s32 0, %v2116
        %v2118 = vrot.slane %v2113, %v2117
        %v2120 = vmul.f32 %v2002, %v2118
        %v2121 = vmul.f32 %v2003, %v2118
        %v2122 = vmul.f32 %v2004, %v2118
        %v2123 = vmul.f32 %v2005, %v2118
        %v2124 = vmul.f32 %v2006, %v2118
        %v2125 = vmul.f32 %v2007, %v2118
        %v2126 = vmul.f32 %v2008, %v2118
        %v2127 = vmul.f32 %v2009, %v2118
        %v2128 = vmul.f32 %v2010, %v2118
        %v2129 = vmul.f32 %v2011, %v2118
        %v2130 = vmul.f32 %v2012, %v2118
        %v2131 = vmul.f32 %v2013, %v2118
        %v2132 = vmul.f32 %v2014, %v2118
        %v2133 = vmul.f32 %v2015, %v2118
        %v2134 = vmul.f32 %v2016, %v2118
        %v2135 = vmul.f32 %v2017, %v2118
        %2136 = vadd.xlane.f32.xlu0 %v2120
        %v2137 = vpop.xlane.xlu0 %2136
        %2138 = vadd.xlane.f32.xlu0 %v2121
        %v2139 = vpop.xlane.xlu0 %2138
        %2140 = vadd.xlane.f32.xlu0 %v2122
        %v2141 = vpop.xlane.xlu0 %2140
        %2142 = vadd.xlane.f32.xlu0 %v2123
        %v2143 = vpop.xlane.xlu0 %2142
        %2144 = vadd.xlane.f32.xlu0 %v2124
        %v2145 = vpop.xlane.xlu0 %2144
        %2146 = vadd.xlane.f32.xlu0 %v2125
        %v2147 = vpop.xlane.xlu0 %2146
        %2148 = vadd.xlane.f32.xlu0 %v2126
        %v2149 = vpop.xlane.xlu0 %2148
        %2150 = vadd.xlane.f32.xlu0 %v2127
        %v2151 = vpop.xlane.xlu0 %2150
        %2152 = vadd.xlane.f32.xlu0 %v2128
        %v2153 = vpop.xlane.xlu0 %2152
        %2154 = vadd.xlane.f32.xlu0 %v2129
        %v2155 = vpop.xlane.xlu0 %2154
        %2156 = vadd.xlane.f32.xlu0 %v2130
        %v2157 = vpop.xlane.xlu0 %2156
        %2158 = vadd.xlane.f32.xlu0 %v2131
        %v2159 = vpop.xlane.xlu0 %2158
        %2160 = vadd.xlane.f32.xlu0 %v2132
        %v2161 = vpop.xlane.xlu0 %2160
        %2162 = vadd.xlane.f32.xlu0 %v2133
        %v2163 = vpop.xlane.xlu0 %2162
        %2164 = vadd.xlane.f32.xlu0 %v2134
        %v2165 = vpop.xlane.xlu0 %2164
        %2166 = vadd.xlane.f32.xlu0 %v2135
        %v2167 = vpop.xlane.xlu0 %2166
        %v2168 = vld [vmem:[#allocation2] sm:$0x1]
        %v2170 = vlaneseq
        %v2171 = vshrl.u32 %v2170, 7
        %v2172 = vsub.s32 0, %v2171
        %v2173 = vrot.slane %v2168, %v2172
        %v2175 = vadd.f32 %v2137, %v2173
        %v2176 = vadd.f32 %v2139, %v2173
        %v2177 = vadd.f32 %v2141, %v2173
        %v2178 = vadd.f32 %v2143, %v2173
        %v2179 = vadd.f32 %v2145, %v2173
        %v2180 = vadd.f32 %v2147, %v2173
        %v2181 = vadd.f32 %v2149, %v2173
        %v2182 = vadd.f32 %v2151, %v2173
        %v2183 = vadd.f32 %v2153, %v2173
        %v2184 = vadd.f32 %v2155, %v2173
        %v2185 = vadd.f32 %v2157, %v2173
        %v2186 = vadd.f32 %v2159, %v2173
        %v2187 = vadd.f32 %v2161, %v2173
        %v2188 = vadd.f32 %v2163, %v2173
        %v2189 = vadd.f32 %v2165, %v2173
        %v2190 = vadd.f32 %v2167, %v2173
        %2191 = vst.msk [vmem:[%s466 + $0x80] sm:$0xff] %vm2096, %v2175
        %2192 = vst.msk [vmem:[%s466 + $0x88] sm:$0xff] %vm2096, %v2176
        %2193 = vst.msk [vmem:[%s466 + $0x90] sm:$0xff] %vm2096, %v2177
        %2194 = vst.msk [vmem:[%s466 + $0x98] sm:$0xff] %vm2096, %v2178
        %2195 = vst.msk [vmem:[%s466 + $0xa0] sm:$0xff] %vm2096, %v2179
        %2196 = vst.msk [vmem:[%s466 + $0xa8] sm:$0xff] %vm2096, %v2180
        %2197 = vst.msk [vmem:[%s466 + $0xb0] sm:$0xff] %vm2096, %v2181
        %2198 = vst.msk [vmem:[%s466 + $0xb8] sm:$0xff] %vm2096, %v2182
        %2199 = vst.msk [vmem:[%s466 + $0xc0] sm:$0xff] %vm2096, %v2183
        %2200 = vst.msk [vmem:[%s466 + $0xc8] sm:$0xff] %vm2096, %v2184
        %2201 = vst.msk [vmem:[%s466 + $0xd0] sm:$0xff] %vm2096, %v2185
        %2202 = vst.msk [vmem:[%s466 + $0xd8] sm:$0xff] %vm2096, %v2186
        %2203 = vst.msk [vmem:[%s466 + $0xe0] sm:$0xff] %vm2096, %v2187
        %2204 = vst.msk [vmem:[%s466 + $0xe8] sm:$0xff] %vm2096, %v2188
        %2205 = vst.msk [vmem:[%s466 + $0xf0] sm:$0xff] %vm2096, %v2189
        %2206 = vst.msk [vmem:[%s466 + $0xf8] sm:$0xff] %vm2096, %v2190
        %s2207 = sand.u32 %s273, 1
        %s2208 = sand.u32 %s273, 1
        %s2209 = smul.addr %s2208, 256
        %s2210 = scalar_lea.vmem [#allocation11], %s2209
        // Predicated region
        $region85: #{_lambda_.1} parent=63 // pred_check
          %p2211 = pneg %p283
        $region86: #{_lambda_.1} parent=63 // pred_check_branch
          %2213 = sbr.rel (%p2211) target = $region88
        $region87: #{_lambda_.1} parent=63 // pred_region
          %s2214 = smul.u32 32, %s29
          %s2215 = ssub.s32 63, %s2214
          %p2216 = scmp.lt.s32.totalorder %s2215, 32
          %s2217 = scalar_select %p2216, %s2215, 32
          %s2218 = smul.u32 128, %s2217
          %p2219 = scmp.ne.s32.totalorder 0, %s2218
          %s2220 = smul.addr %s2214, 8
          %s2221 = scalar_lea.vmem %s11, %s2220
          // Predicated region
          $region89: #{_lambda_.1} parent=87 // pred_check
            %p2222 = pneg %p2219
          $region90: #{_lambda_.1} parent=87 // pred_check_branch
            %2224 = sbr.rel (%p2222) target = $region92
          $region91: #{_lambda_.1} parent=87 // pred_region
            // Predicated region
            $region93: #{_lambda_.1} parent=91 // pred_check
              _
            $region94: #{_lambda_.1} parent=91 // pred_check_branch
              %2226 = sbr.rel (0) target = $region96
            $region95: #{_lambda_.1} parent=91 // pred_region
              // Predicated region
              $region115: #{_lambda_.1} parent=95 // pred_check
                _
              $region116: #{_lambda_.1} parent=95 // pred_check_branch
                %2337 = sbr.rel (0) target = $region118
              $region117: #{_lambda_.1} parent=95 // pred_region
                %s2338 = sshrl.u32 %s2217, 5
                // While loop
                $region119: #{_lambda_.1} parent=117 // loop_pre_header
                  _
                $region120: #{_lambda_.1} parent=117 // loop_header
                  %s2340 = sphi 0, %s2342
                  %p2341 = scmp.ge.s32.totalorder %s2340, %s2338
                  %s2345 = sphi 0, %s2414
                  %s2346 = sphi %s2210, %s2417
                  %s2347 = sphi %s2221, %s2418
                $region121: #{_lambda_.1} parent=117 // loop_header_branch
                  %2344 = sbr.rel (%p2341) target = $region125
                $region122: #{_lambda_.1} parent=117 // loop_body
                  %v2348 = vld [vmem:[%s2346] sm:$0xff]
                  %2349 = vst [vmem:[%s2347] sm:$0xff] %v2348
                  %v2350 = vld [vmem:[%s2346 + $0x8] sm:$0xff]
                  %2351 = vst [vmem:[%s2347 + $0x8] sm:$0xff] %v2350
                  %v2352 = vld [vmem:[%s2346 + $0x10] sm:$0xff]
                  %2353 = vst [vmem:[%s2347 + $0x10] sm:$0xff] %v2352
                  %v2354 = vld [vmem:[%s2346 + $0x18] sm:$0xff]
                  %2355 = vst [vmem:[%s2347 + $0x18] sm:$0xff] %v2354
                  %v2356 = vld [vmem:[%s2346 + $0x20] sm:$0xff]
                  %2357 = vst [vmem:[%s2347 + $0x20] sm:$0xff] %v2356
                  %v2358 = vld [vmem:[%s2346 + $0x28] sm:$0xff]
                  %2359 = vst [vmem:[%s2347 + $0x28] sm:$0xff] %v2358
                  %v2360 = vld [vmem:[%s2346 + $0x30] sm:$0xff]
                  %2361 = vst [vmem:[%s2347 + $0x30] sm:$0xff] %v2360
                  %v2362 = vld [vmem:[%s2346 + $0x38] sm:$0xff]
                  %2363 = vst [vmem:[%s2347 + $0x38] sm:$0xff] %v2362
                  %v2364 = vld [vmem:[%s2346 + $0x40] sm:$0xff]
                  %2365 = vst [vmem:[%s2347 + $0x40] sm:$0xff] %v2364
                  %v2366 = vld [vmem:[%s2346 + $0x48] sm:$0xff]
                  %2367 = vst [vmem:[%s2347 + $0x48] sm:$0xff] %v2366
                  %v2368 = vld [vmem:[%s2346 + $0x50] sm:$0xff]
                  %2369 = vst [vmem:[%s2347 + $0x50] sm:$0xff] %v2368
                  %v2370 = vld [vmem:[%s2346 + $0x58] sm:$0xff]
                  %2371 = vst [vmem:[%s2347 + $0x58] sm:$0xff] %v2370
                  %v2372 = vld [vmem:[%s2346 + $0x60] sm:$0xff]
                  %2373 = vst [vmem:[%s2347 + $0x60] sm:$0xff] %v2372
                  %v2374 = vld [vmem:[%s2346 + $0x68] sm:$0xff]
                  %2375 = vst [vmem:[%s2347 + $0x68] sm:$0xff] %v2374
                  %v2376 = vld [vmem:[%s2346 + $0x70] sm:$0xff]
                  %2377 = vst [vmem:[%s2347 + $0x70] sm:$0xff] %v2376
                  %v2378 = vld [vmem:[%s2346 + $0x78] sm:$0xff]
                  %2379 = vst [vmem:[%s2347 + $0x78] sm:$0xff] %v2378
                  %v2380 = vld [vmem:[%s2346 + $0x80] sm:$0xff]
                  %2381 = vst [vmem:[%s2347 + $0x80] sm:$0xff] %v2380
                  %v2382 = vld [vmem:[%s2346 + $0x88] sm:$0xff]
                  %2383 = vst [vmem:[%s2347 + $0x88] sm:$0xff] %v2382
                  %v2384 = vld [vmem:[%s2346 + $0x90] sm:$0xff]
                  %2385 = vst [vmem:[%s2347 + $0x90] sm:$0xff] %v2384
                  %v2386 = vld [vmem:[%s2346 + $0x98] sm:$0xff]
                  %2387 = vst [vmem:[%s2347 + $0x98] sm:$0xff] %v2386
                  %v2388 = vld [vmem:[%s2346 + $0xa0] sm:$0xff]
                  %2389 = vst [vmem:[%s2347 + $0xa0] sm:$0xff] %v2388
                  %v2390 = vld [vmem:[%s2346 + $0xa8] sm:$0xff]
                  %2391 = vst [vmem:[%s2347 + $0xa8] sm:$0xff] %v2390
                  %v2392 = vld [vmem:[%s2346 + $0xb0] sm:$0xff]
                  %2393 = vst [vmem:[%s2347 + $0xb0] sm:$0xff] %v2392
                  %v2394 = vld [vmem:[%s2346 + $0xb8] sm:$0xff]
                  %2395 = vst [vmem:[%s2347 + $0xb8] sm:$0xff] %v2394
                  %v2396 = vld [vmem:[%s2346 + $0xc0] sm:$0xff]
                  %2397 = vst [vmem:[%s2347 + $0xc0] sm:$0xff] %v2396
                  %v2398 = vld [vmem:[%s2346 + $0xc8] sm:$0xff]
                  %2399 = vst [vmem:[%s2347 + $0xc8] sm:$0xff] %v2398
                  %v2400 = vld [vmem:[%s2346 + $0xd0] sm:$0xff]
                  %2401 = vst [vmem:[%s2347 + $0xd0] sm:$0xff] %v2400
                  %v2402 = vld [vmem:[%s2346 + $0xd8] sm:$0xff]
                  %2403 = vst [vmem:[%s2347 + $0xd8] sm:$0xff] %v2402
                  %v2404 = vld [vmem:[%s2346 + $0xe0] sm:$0xff]
                  %2405 = vst [vmem:[%s2347 + $0xe0] sm:$0xff] %v2404
                  %v2406 = vld [vmem:[%s2346 + $0xe8] sm:$0xff]
                  %2407 = vst [vmem:[%s2347 + $0xe8] sm:$0xff] %v2406
                  %v2408 = vld [vmem:[%s2346 + $0xf0] sm:$0xff]
                  %2409 = vst [vmem:[%s2347 + $0xf0] sm:$0xff] %v2408
                  %v2410 = vld [vmem:[%s2346 + $0xf8] sm:$0xff]
                  %2411 = vst [vmem:[%s2347 + $0xf8] sm:$0xff] %v2410
                  %s2412 = sadd.s32 1, %s2345
                  %p2413 = scmp.ge.s32.totalorder %s2412, %s2338
                  %s2414 = scalar_select %p2413, 0, %s2412
                  %s2415 = smul.u32 %s2414, 256
                  %s2416 = smul.u32 %s2414, 256
                  %s2417 = scalar_lea.vmem %s2210, %s2415 [#allocation11]
                  %s2418 = scalar_lea.vmem %s2221, %s2416
                $region123: #{_lambda_.1} parent=117 // loop_footer
                  %s2342 = sadd.s32 %s2340, 1
                $region124: #{_lambda_.1} parent=117 // loop_footer_branch
                  %2339 = sbr.rel target = $region120
                $region125: #{_lambda_.1} parent=117 // loop_exit
                  _
                %s2419 = sshrl.u32 %s2217, 5
                %s2420 = sand.u32 %s2217, 31
                %s2421 = smul.u32 %s2419, 32
                %s2422 = smul.u32 8, %s2421
                %s2423 = scalar_lea.vmem %s2210, %s2422 [#allocation11]
                %s2424 = smul.u32 8, %s2421
                %s2425 = scalar_lea.vmem %s2221, %s2424
                // While loop
                $region126: #{_lambda_.1} parent=117 // loop_pre_header
                  _
                $region127: #{_lambda_.1} parent=117 // loop_header
                  %s2427 = sphi 0, %s2429
                  %p2428 = scmp.ge.s32.totalorder %s2427, %s2420
                  %s2432 = sphi 0, %s2439
                  %s2433 = sphi %s2423, %s2442
                  %s2434 = sphi %s2425, %s2443
                $region128: #{_lambda_.1} parent=117 // loop_header_branch
                  %2431 = sbr.rel (%p2428) target = $region132
                $region129: #{_lambda_.1} parent=117 // loop_body
                  %v2435 = vld [vmem:[%s2433] sm:$0xff]
                  %2436 = vst [vmem:[%s2434] sm:$0xff] %v2435
                  %s2437 = sadd.s32 1, %s2432
                  %p2438 = scmp.ge.s32.totalorder %s2437, %s2420
                  %s2439 = scalar_select %p2438, 0, %s2437
                  %s2440 = smul.u32 %s2439, 8
                  %s2441 = smul.u32 %s2439, 8
                  %s2442 = scalar_lea.vmem %s2423, %s2440 [#allocation11]
                  %s2443 = scalar_lea.vmem %s2425, %s2441
                $region130: #{_lambda_.1} parent=117 // loop_footer
                  %s2429 = sadd.s32 %s2427, 1
                $region131: #{_lambda_.1} parent=117 // loop_footer_branch
                  %2426 = sbr.rel target = $region127
                $region132: #{_lambda_.1} parent=117 // loop_exit
                  _
              $region118: #{_lambda_.1} parent=95 // pred_fallthru
                _
              // Predicated region
              $region133: #{_lambda_.1} parent=95 // pred_check
                _
              $region134: #{_lambda_.1} parent=95 // pred_check_branch
                %2445 = sbr.rel target = $region136
              $region135: #{_lambda_.1} parent=95 // pred_region
                _
              $region136: #{_lambda_.1} parent=95 // pred_fallthru
                _
            $region96: #{_lambda_.1} parent=91 // pred_fallthru
              _
            // Predicated region
            $region97: #{_lambda_.1} parent=91 // pred_check
              _
            $region98: #{_lambda_.1} parent=91 // pred_check_branch
              %2228 = sbr.rel target = $region100
            $region99: #{_lambda_.1} parent=91 // pred_region
              %s2230 = sshrl.u32 %s2217, 5
              // While loop
              $region101: #{_lambda_.1} parent=99 // loop_pre_header
                _
              $region102: #{_lambda_.1} parent=99 // loop_header
                %s2232 = sphi 0, %s2234
                %p2233 = scmp.ge.s32.totalorder %s2232, %s2230
                %s2237 = sphi 0, %s2306
                %s2238 = sphi %s2210, %s2309
                %s2239 = sphi %s2221, %s2310
              $region103: #{_lambda_.1} parent=99 // loop_header_branch
                %2236 = sbr.rel (%p2233) target = $region107
              $region104: #{_lambda_.1} parent=99 // loop_body
                %v2240 = vld [vmem:[%s2238] sm:$0xff]
                %2241 = vst [vmem:[%s2239] sm:$0xff] %v2240
                %v2242 = vld [vmem:[%s2238 + $0x8] sm:$0xff]
                %2243 = vst [vmem:[%s2239 + $0x8] sm:$0xff] %v2242
                %v2244 = vld [vmem:[%s2238 + $0x10] sm:$0xff]
                %2245 = vst [vmem:[%s2239 + $0x10] sm:$0xff] %v2244
                %v2246 = vld [vmem:[%s2238 + $0x18] sm:$0xff]
                %2247 = vst [vmem:[%s2239 + $0x18] sm:$0xff] %v2246
                %v2248 = vld [vmem:[%s2238 + $0x20] sm:$0xff]
                %2249 = vst [vmem:[%s2239 + $0x20] sm:$0xff] %v2248
                %v2250 = vld [vmem:[%s2238 + $0x28] sm:$0xff]
                %2251 = vst [vmem:[%s2239 + $0x28] sm:$0xff] %v2250
                %v2252 = vld [vmem:[%s2238 + $0x30] sm:$0xff]
                %2253 = vst [vmem:[%s2239 + $0x30] sm:$0xff] %v2252
                %v2254 = vld [vmem:[%s2238 + $0x38] sm:$0xff]
                %2255 = vst [vmem:[%s2239 + $0x38] sm:$0xff] %v2254
                %v2256 = vld [vmem:[%s2238 + $0x40] sm:$0xff]
                %2257 = vst [vmem:[%s2239 + $0x40] sm:$0xff] %v2256
                %v2258 = vld [vmem:[%s2238 + $0x48] sm:$0xff]
                %2259 = vst [vmem:[%s2239 + $0x48] sm:$0xff] %v2258
                %v2260 = vld [vmem:[%s2238 + $0x50] sm:$0xff]
                %2261 = vst [vmem:[%s2239 + $0x50] sm:$0xff] %v2260
                %v2262 = vld [vmem:[%s2238 + $0x58] sm:$0xff]
                %2263 = vst [vmem:[%s2239 + $0x58] sm:$0xff] %v2262
                %v2264 = vld [vmem:[%s2238 + $0x60] sm:$0xff]
                %2265 = vst [vmem:[%s2239 + $0x60] sm:$0xff] %v2264
                %v2266 = vld [vmem:[%s2238 + $0x68] sm:$0xff]
                %2267 = vst [vmem:[%s2239 + $0x68] sm:$0xff] %v2266
                %v2268 = vld [vmem:[%s2238 + $0x70] sm:$0xff]
                %2269 = vst [vmem:[%s2239 + $0x70] sm:$0xff] %v2268
                %v2270 = vld [vmem:[%s2238 + $0x78] sm:$0xff]
                %2271 = vst [vmem:[%s2239 + $0x78] sm:$0xff] %v2270
                %v2272 = vld [vmem:[%s2238 + $0x80] sm:$0xff]
                %2273 = vst [vmem:[%s2239 + $0x80] sm:$0xff] %v2272
                %v2274 = vld [vmem:[%s2238 + $0x88] sm:$0xff]
                %2275 = vst [vmem:[%s2239 + $0x88] sm:$0xff] %v2274
                %v2276 = vld [vmem:[%s2238 + $0x90] sm:$0xff]
                %2277 = vst [vmem:[%s2239 + $0x90] sm:$0xff] %v2276
                %v2278 = vld [vmem:[%s2238 + $0x98] sm:$0xff]
                %2279 = vst [vmem:[%s2239 + $0x98] sm:$0xff] %v2278
                %v2280 = vld [vmem:[%s2238 + $0xa0] sm:$0xff]
                %2281 = vst [vmem:[%s2239 + $0xa0] sm:$0xff] %v2280
                %v2282 = vld [vmem:[%s2238 + $0xa8] sm:$0xff]
                %2283 = vst [vmem:[%s2239 + $0xa8] sm:$0xff] %v2282
                %v2284 = vld [vmem:[%s2238 + $0xb0] sm:$0xff]
                %2285 = vst [vmem:[%s2239 + $0xb0] sm:$0xff] %v2284
                %v2286 = vld [vmem:[%s2238 + $0xb8] sm:$0xff]
                %2287 = vst [vmem:[%s2239 + $0xb8] sm:$0xff] %v2286
                %v2288 = vld [vmem:[%s2238 + $0xc0] sm:$0xff]
                %2289 = vst [vmem:[%s2239 + $0xc0] sm:$0xff] %v2288
                %v2290 = vld [vmem:[%s2238 + $0xc8] sm:$0xff]
                %2291 = vst [vmem:[%s2239 + $0xc8] sm:$0xff] %v2290
                %v2292 = vld [vmem:[%s2238 + $0xd0] sm:$0xff]
                %2293 = vst [vmem:[%s2239 + $0xd0] sm:$0xff] %v2292
                %v2294 = vld [vmem:[%s2238 + $0xd8] sm:$0xff]
                %2295 = vst [vmem:[%s2239 + $0xd8] sm:$0xff] %v2294
                %v2296 = vld [vmem:[%s2238 + $0xe0] sm:$0xff]
                %2297 = vst [vmem:[%s2239 + $0xe0] sm:$0xff] %v2296
                %v2298 = vld [vmem:[%s2238 + $0xe8] sm:$0xff]
                %2299 = vst [vmem:[%s2239 + $0xe8] sm:$0xff] %v2298
                %v2300 = vld [vmem:[%s2238 + $0xf0] sm:$0xff]
                %2301 = vst [vmem:[%s2239 + $0xf0] sm:$0xff] %v2300
                %v2302 = vld [vmem:[%s2238 + $0xf8] sm:$0xff]
                %2303 = vst [vmem:[%s2239 + $0xf8] sm:$0xff] %v2302
                %s2304 = sadd.s32 1, %s2237
                %p2305 = scmp.ge.s32.totalorder %s2304, %s2230
                %s2306 = scalar_select %p2305, 0, %s2304
                %s2307 = smul.u32 %s2306, 256
                %s2308 = smul.u32 %s2306, 256
                %s2309 = scalar_lea.vmem %s2210, %s2307 [#allocation11]
                %s2310 = scalar_lea.vmem %s2221, %s2308
              $region105: #{_lambda_.1} parent=99 // loop_footer
                %s2234 = sadd.s32 %s2232, 1
              $region106: #{_lambda_.1} parent=99 // loop_footer_branch
                %2231 = sbr.rel target = $region102
              $region107: #{_lambda_.1} parent=99 // loop_exit
                _
              %s2311 = sshrl.u32 %s2217, 5
              %s2312 = sand.u32 %s2217, 31
              %s2313 = smul.u32 %s2311, 32
              %s2314 = smul.u32 8, %s2313
              %s2315 = scalar_lea.vmem %s2210, %s2314 [#allocation11]
              %s2316 = smul.u32 8, %s2313
              %s2317 = scalar_lea.vmem %s2221, %s2316
              // While loop
              $region108: #{_lambda_.1} parent=99 // loop_pre_header
                _
              $region109: #{_lambda_.1} parent=99 // loop_header
                %s2319 = sphi 0, %s2321
                %p2320 = scmp.ge.s32.totalorder %s2319, %s2312
                %s2324 = sphi 0, %s2331
                %s2325 = sphi %s2315, %s2334
                %s2326 = sphi %s2317, %s2335
              $region110: #{_lambda_.1} parent=99 // loop_header_branch
                %2323 = sbr.rel (%p2320) target = $region114
              $region111: #{_lambda_.1} parent=99 // loop_body
                %v2327 = vld [vmem:[%s2325] sm:$0xff]
                %2328 = vst [vmem:[%s2326] sm:$0xff] %v2327
                %s2329 = sadd.s32 1, %s2324
                %p2330 = scmp.ge.s32.totalorder %s2329, %s2312
                %s2331 = scalar_select %p2330, 0, %s2329
                %s2332 = smul.u32 %s2331, 8
                %s2333 = smul.u32 %s2331, 8
                %s2334 = scalar_lea.vmem %s2315, %s2332 [#allocation11]
                %s2335 = scalar_lea.vmem %s2317, %s2333
              $region112: #{_lambda_.1} parent=99 // loop_footer
                %s2321 = sadd.s32 %s2319, 1
              $region113: #{_lambda_.1} parent=99 // loop_footer_branch
                %2318 = sbr.rel target = $region109
              $region114: #{_lambda_.1} parent=99 // loop_exit
                _
            $region100: #{_lambda_.1} parent=91 // pred_fallthru
              _
          $region92: #{_lambda_.1} parent=87 // pred_fallthru
            _
          %2446 = vnop
        $region88: #{_lambda_.1} parent=63 // pred_fallthru
          _
      $region64: #{_lambda_.1} parent=5 // pred_fallthru
        _
      %p2447 = scmp.le.s32.totalorder 2, %s24
      // Predicated region
      $region137: #{_lambda_.1} parent=5 // pred_check
        %p2448 = pneg %p2447
      $region138: #{_lambda_.1} parent=5 // pred_check_branch
        %2450 = sbr.rel (%p2448) target = $region140
      $region139: #{_lambda_.1} parent=5 // pred_region
        %s2451 = ssub.s32 %s24, 2
        // Predicated region
        $region141: #{_lambda_.1} parent=139 // pred_check
          %p2452 = pneg %p289
        $region142: #{_lambda_.1} parent=139 // pred_check_branch
          %2454 = sbr.rel (%p2452) target = $region144
        $region143: #{_lambda_.1} parent=139 // pred_region
          %s2455 = sand.u32 %s274, 1
          %s2456 = sand.u32 %s274, 1
          %s2457 = smul.addr %s2456, 256
          %s2458 = scalar_lea.vmem [#allocation11], %s2457
        $region144: #{_lambda_.1} parent=139 // pred_fallthru
          _
      $region140: #{_lambda_.1} parent=5 // pred_fallthru
        _
    $region6: #{_lambda_.1} parent=1 // loop_footer
      %s28 = sadd.s32 1, %s24
    $region7: #{_lambda_.1} parent=1 // loop_footer_branch
      %23 = sbr.rel target = $region3
    $region8: #{_lambda_.1} parent=1 // loop_exit
      _
    %2459 = vsyncpa [#allocation4], 1
    %s2460 = scalar_lea.sflag [#allocation4], 1
    %2461 = vsyncpa %s2460, 1
    %2462 = vsyncpa [#allocation6], 1
    %2463 = vsyncpa [#allocation9], 1

</llo_original>
